<compile_context>
chip_gen: v7x
topology: tpu7x:2x2x1
jax: 0.10.0
libtpu: 0.0.40
codegen_flags: <defaults>
</compile_context>

<pallas_src>
import functools

import jax
import jax.numpy as jnp
import numpy as np
from jax.experimental import pallas as pl
from jax.experimental.pallas import tpu as pltpu


# ----------------------------------------------------------------------------
# Fused kernel: all TemporalBlocks + head for one (R = groups_per_tile*L, P*C) tile
# ----------------------------------------------------------------------------
def fused_tcn_kernel(x_ref, *refs, L, k, dilations, has_down_flags, compute_dtype):
    """refs = [per layer: w1, b1, w2, b2, (wd, bd)] + [w_head, b_lin] + [o_ref]

    w1/w2: (k*P*Cin, P*Cout) tap-stacked, block-diagonal (P lane-packed sequences);
           tap j = rows [j*P*Cin, (j+1)*P*Cin), paired with time shift (k-1-j)*d.
    wd:    (P*Cin, P*Cout) block-diagonal 1x1 downsample (only when Cin != Cout).
    b*:    (1, P*Cout) f32.   w_head: (P*C, P) block-diagonal head weight.
    x_ref: (R, P*Cin0) rows = (group, time);  o_ref: (R, P) per-timestep probabilities.
    """
    o_ref = refs[-1]
    w_head_ref, b_lin_ref = refs[-3], refs[-2]
    layer_refs = refs[:-3]

    R = x_ref.shape[0]

    # --- hoisted causal keep-masks: one per distinct (shift, width) pair ----------
    # (JAX traces once, so memoizing the traced values == hoisting; reused by every
    #  conv in every layer that needs the same shift.)
    t_cache, keep_cache = {}, {}

    def t_of(width):
        if width not in t_cache:
            t_cache[width] = jax.lax.broadcasted_iota(jnp.int32, (R, width), 0) % L
        return t_cache[width]

    def keep(s, width):
        key = (s, width)
        if key not in keep_cache:
            keep_cache[key] = t_of(width) >= s
        return keep_cache[key]

    def causal_conv(inp, w_ref, b_ref, d):
        """Causal dilated conv: per-tap sublane roll + mask + matmul, f32 accumulate."""
        pcin = w_ref.shape[0] // k
        acc = None
        for j in range(k):
            s = (k - 1 - j) * d
            if s >= L:          # shifted copy lies entirely in the zero left-padding
                continue
            if s == 0:
                xs = inp
            else:
                # pltpu.roll == jnp.roll: row r receives row r-s (XLU slot, no relayout
                # copy).  Rows with t_local < s hold other sequences' history / the
                # wrap-around, so they are zeroed (== zero left-padding + Chomp1d).
                xs = pltpu.roll(inp, shift=s, axis=0)
                xs = jnp.where(keep(s, xs.shape[1]), xs, 0.0)
            part = jnp.dot(xs.astype(compute_dtype),
                           w_ref[j * pcin:(j + 1) * pcin, :],
                           preferred_element_type=jnp.float32)
            acc = part if acc is None else acc + part
        return acc + b_ref[...]                     # (1, P*Cout) bias broadcasts

    h = x_ref[...].astype(jnp.float32)              # (R, P*Cin0); elementwise stays f32
    ri = 0
    for li, d in enumerate(dilations):
        w1, b1, w2, b2 = layer_refs[ri:ri + 4]
        ri += 4
        if has_down_flags[li]:
            wd, bd = layer_refs[ri:ri + 2]
            ri += 2
        h1 = jnp.maximum(causal_conv(h, w1, b1, d), 0.0)    # conv1 + chomp + relu
        h2 = jnp.maximum(causal_conv(h1, w2, b2, d), 0.0)   # conv2 + chomp + relu
        if has_down_flags[li]:                              # 1x1 residual projection
            res = jnp.dot(h.astype(compute_dtype), wd[...],
                          preferred_element_type=jnp.float32) + bd[...]
        else:
            res = h
        h = jnp.maximum(h2 + res, 0.0)

    # Head: Linear(C -> 1) + sigmoid, folded per packed sequence into a (P*C, P)
    # block-diagonal weight -> one small matmul, no lane-split/reshape of h.
    logits = jnp.dot(h.astype(compute_dtype), w_head_ref[...],
                     preferred_element_type=jnp.float32) + b_lin_ref[...]
    o_ref[...] = jax.nn.sigmoid(logits)


# ----------------------------------------------------------------------------
# Wrapper
# ----------------------------------------------------------------------------
def _block_diag(w, P):
    """(Cin, Cout) -> (P*Cin, P*Cout) block-diagonal replication for lane packing."""
    if P == 1:
        return w
    cin, cout = w.shape
    eye = jnp.eye(P, dtype=w.dtype)
    return jnp.einsum("pq,io->piqo", eye, w).reshape(P * cin, P * cout)


def _choose_tiling(B, L, n_channel, target_rows=2048):
    """Pick the lane-pack factor P (sequences side-by-side on the 128-lane axis) and
    how many packed groups to fold onto the sublane axis per grid step."""
    P = 1
    for p in range(1, B + 1):
        if B % p == 0 and p * n_channel <= 128:
            P = p
    G = B // P                                    # number of packed sequence-groups
    cands = []
    for g in range(1, G + 1):
        if G % g:
            continue
        R = g * L
        if R > target_rows and g != 1:
            continue
        if (R % 8) and g != G:                    # non-full tiles need 8-aligned rows
            continue
        cands.append(g)
    if not cands:
        cands = [G]
    # Prefer >= 2 grid tiles so the "parallel" axis can span both v7x TensorCores.
    multi = [g for g in cands if G // g >= 2]
    gpt = max(multi if multi else cands)
    return P, G, gpt


def _scoped_vmem_limit():
    # 3/4 of physical VMEM (no 64 MiB clamp): ~96 MiB on v5e/v6e, ~48 MiB on v7x.
    try:
        cap = int(pltpu.get_tpu_info().vmem_capacity_bytes)
    except Exception:
        return None
    return (cap * 3) // 4


def causal_conv_discriminator_forward(x, params, kernel_size, channel_last=True,
                                      compute_dtype=jnp.float32, target_rows=2048):
    """Equivalent of CausalConvDiscriminator.forward.

    Input : (B, L, input_size) if channel_last else (B, input_size, L)
    Output: (B, L, 1) probabilities.
    """
    if not channel_last:
        x = jnp.transpose(x, (0, 2, 1))           # glue: to (B, L, C) layout
    B, L, cin0 = x.shape
    k = kernel_size
    n_layers = len(params["blocks"])
    n_channel = params["blocks"][-1]["w2"].shape[-1]
    dilations = tuple(2 ** i for i in range(n_layers))
    has_down = tuple("wd" in blk for blk in params["blocks"])

    P, G, gpt = _choose_tiling(B, L, n_channel, target_rows)
    R = gpt * L
    num_tiles = G // gpt
    # TODO(synk): for very long L additionally tile time with a causal halo
    # (receptive_field-1 rows) so a tile also fits v7x's 64 MiB VMEM.

    # Fold: sublanes = (group, time), lanes = (sequence-in-group, channel).
    xp = (x.astype(jnp.float32)
           .reshape(G, P, L, cin0).transpose(0, 2, 1, 3).reshape(G * L, P * cin0))

    def full(arr):                                # VMEM-resident full-array block
        return pl.BlockSpec(arr.shape, lambda i: (0, 0))

    args = [xp]
    in_specs = [pl.BlockSpec((R, P * cin0), lambda i: (i, 0))]
    for blk in params["blocks"]:
        w1 = jnp.concatenate([_block_diag(blk["w1"][j], P) for j in range(k)],
                             axis=0).astype(compute_dtype)       # (k*P*Cin, P*C)
        w2 = jnp.concatenate([_block_diag(blk["w2"][j], P) for j in range(k)],
                             axis=0).astype(compute_dtype)       # (k*P*C,  P*C)
        b1 = jnp.tile(blk["b1"].astype(jnp.float32), (1, P))
        b2 = jnp.tile(blk["b2"].astype(jnp.float32), (1, P))
        args += [w1, b1, w2, b2]
        in_specs += [full(w1), full(b1), full(w2), full(b2)]
        if "wd" in blk:
            wd = _block_diag(blk["wd"], P).astype(compute_dtype)
            bd = jnp.tile(blk["bd"].astype(jnp.float32), (1, P))
            args += [wd, bd]
            in_specs += [full(wd), full(bd)]
    # TODO(synk): when P*n_channel % 128 == 0, fuse wd into w1's output columns and
    # single-buffer the constant-index weight specs (pl.Buffered(1)) for large C.
    w_head = _block_diag(params["w_lin"].reshape(-1, 1), P).astype(compute_dtype)  # (P*C, P)
    b_lin = params["b_lin"].astype(jnp.float32)                                    # (1, 1)
    args += [w_head, b_lin]
    in_specs += [full(w_head), full(b_lin)]

    kern = functools.partial(fused_tcn_kernel, L=L, k=k, dilations=dilations,
                             has_down_flags=has_down, compute_dtype=compute_dtype)
    out = pl.pallas_call(
        kern,
        out_shape=jax.ShapeDtypeStruct((G * L, P), jnp.float32),
        grid=(num_tiles,),
        in_specs=in_specs,
        out_specs=pl.BlockSpec((R, P), lambda i: (i, 0)),
        compiler_params=pltpu.CompilerParams(
            dimension_semantics=("parallel",),     # batch-group tiles shard across TCs
            vmem_limit_bytes=_scoped_vmem_limit()),
    )(*args)
    # (G*L, P) -> (B, L, 1)
    return out.reshape(G, L, P).transpose(0, 2, 1).reshape(B, L, 1)


# ----------------------------------------------------------------------------
# Deterministic synthetic parameters (shapes match the PyTorch module)
# ----------------------------------------------------------------------------
def make_params(key, input_size, n_layers, n_channel, k, scale=0.1):
    blocks = []
    in_ch = input_size
    for _ in range(n_layers):
        key, k0, k1, k2, k3, k4, k5 = jax.random.split(key, 7)
        layer = {
            # Conv1d weight (Cout, Cin, k) stored tap-major as (k, Cin, Cout)
            "w1": scale * jax.random.normal(k0, (k, in_ch, n_channel), jnp.float32),
            "b1": scale * jax.random.normal(k1, (1, n_channel), jnp.float32),
            "w2": scale * jax.random.normal(k2, (k, n_channel, n_channel), jnp.float32),
            "b2": scale * jax.random.normal(k3, (1, n_channel), jnp.float32),
        }
        if in_ch != n_channel:            # downsample = Conv1d(in, out, 1)
            layer["wd"] = scale * jax.random.normal(k4, (in_ch, n_channel), jnp.float32)
            layer["bd"] = scale * jax.random.normal(k5, (1, n_channel), jnp.float32)
        blocks.append(layer)
        in_ch = n_channel
    key, ka, kb = jax.random.split(key, 3)
    return {
        "blocks": blocks,
        "w_lin": scale * jax.random.normal(ka, (1, n_channel), jnp.float32),
        "b_lin": scale * jax.random.normal(kb, (1, 1), jnp.float32),
    }


# ----------------------------------------------------------------------------
# Pure-JAX reference (lax.conv_general_dilated) for verification
# ----------------------------------------------------------------------------
def reference_forward(x, params, k):
    h = jnp.transpose(x, (0, 2, 1))                      # (B, C, L), like PyTorch
    for i, layer in enumerate(params["blocks"]):
        d = 2 ** i
        pad = (k - 1) * d

        def conv(inp, w_kio, b):
            w = jnp.transpose(w_kio, (2, 1, 0))          # -> (Cout, Cin, k)
            y = jax.lax.conv_general_dilated(
                inp, w, window_strides=(1,), padding=[(pad, 0)],
                rhs_dilation=(d,), dimension_numbers=("NCH", "OIH", "NCH"))
            return y + b.reshape(1, -1, 1)

        h1 = jax.nn.relu(conv(h, layer["w1"], layer["b1"]))
        h2 = jax.nn.relu(conv(h1, layer["w2"], layer["b2"]))
        if "wd" in layer:
            res = jnp.einsum("bcl,co->bol", h, layer["wd"]) + layer["bd"].reshape(1, -1, 1)
        else:
            res = h
        h = jax.nn.relu(h2 + res)
    y = jnp.transpose(h, (0, 2, 1))                      # (B, L, C)
    out = jnp.sum(y * params["w_lin"][None], axis=-1, keepdims=True)
    out = out + params["b_lin"].reshape(1, 1, 1)
    return jax.nn.sigmoid(out)


if __name__ == "__main__":
    # CausalConvDiscriminator(input_size=4, n_layers=3, n_channel=32,
    #                         kernel_size=2, dropout=0)
    B, L = 2, 16
    input_size, n_layers, n_channel, kernel_size = 4, 3, 32, 2

    key = jax.random.PRNGKey(0)
    kx, kp = jax.random.split(key)
    x = jax.random.normal(kx, (B, L, input_size), jnp.float32)   # (batch, seq, feat)
    params = make_params(kp, input_size, n_layers, n_channel, kernel_size)

    ref = jax.block_until_ready(reference_forward(x, params, kernel_size))

    # f32 compute path (exact check)
    out = causal_conv_discriminator_forward(x, params, kernel_size, channel_last=True)
    out = jax.block_until_ready(out)
    assert out.shape == (B, L, 1)
    np.testing.assert_allclose(np.asarray(out), np.asarray(ref), rtol=1e-5, atol=2e-5)

    # bf16 MXU-input path (v6e/v7x); accumulation and elementwise math stay f32
    out_bf16 = causal_conv_discriminator_forward(
        x, params, kernel_size, channel_last=True, compute_dtype=jnp.bfloat16)
    out_bf16 = jax.block_until_ready(out_bf16)
    np.testing.assert_allclose(np.asarray(out_bf16), np.asarray(ref), rtol=5e-2, atol=3e-2)

    print("KERNEL_OK")
</pallas_src>

<mosaic_0001>
module attributes {stable_mosaic.version = 11 : i64} {
  func.func @fused_tcn_kernel(%arg0: i32, %arg1: memref<16x8xf32, #tpu.memory_space<vmem>>, %arg2: memref<16x64xf32, #tpu.memory_space<vmem>>, %arg3: memref<1x64xf32, #tpu.memory_space<vmem>>, %arg4: memref<128x64xf32, #tpu.memory_space<vmem>>, %arg5: memref<1x64xf32, #tpu.memory_space<vmem>>, %arg6: memref<8x64xf32, #tpu.memory_space<vmem>>, %arg7: memref<1x64xf32, #tpu.memory_space<vmem>>, %arg8: memref<128x64xf32, #tpu.memory_space<vmem>>, %arg9: memref<1x64xf32, #tpu.memory_space<vmem>>, %arg10: memref<128x64xf32, #tpu.memory_space<vmem>>, %arg11: memref<1x64xf32, #tpu.memory_space<vmem>>, %arg12: memref<128x64xf32, #tpu.memory_space<vmem>>, %arg13: memref<1x64xf32, #tpu.memory_space<vmem>>, %arg14: memref<128x64xf32, #tpu.memory_space<vmem>>, %arg15: memref<1x64xf32, #tpu.memory_space<vmem>>, %arg16: memref<64x2xf32, #tpu.memory_space<vmem>>, %arg17: memref<1x1xf32, #tpu.memory_space<vmem>>, %arg18: memref<16x2xf32, #tpu.memory_space<vmem>>) attributes {dimension_semantics = [#tpu.dimension_semantics<parallel>], iteration_bounds = array<i64: 1>, scalar_prefetch = 0 : i64, scratch_operands = 0 : i64, tpu.core_type = #tpu.core_type<tc>, window_params = [{transform_indices = @transform_0, window_bounds = array<i64: 16, 8>}, {pipeline_mode = #tpu.pipeline_mode<synchronous>, transform_indices = @transform_1, window_bounds = array<i64: 16, 64>}, {pipeline_mode = #tpu.pipeline_mode<synchronous>, transform_indices = @transform_2, window_bounds = array<i64: 1, 64>}, {pipeline_mode = #tpu.pipeline_mode<synchronous>, transform_indices = @transform_3, window_bounds = array<i64: 128, 64>}, {pipeline_mode = #tpu.pipeline_mode<synchronous>, transform_indices = @transform_4, window_bounds = array<i64: 1, 64>}, {pipeline_mode = #tpu.pipeline_mode<synchronous>, transform_indices = @transform_5, window_bounds = array<i64: 8, 64>}, {pipeline_mode = #tpu.pipeline_mode<synchronous>, transform_indices = @transform_6, window_bounds = array<i64: 1, 64>}, {pipeline_mode = #tpu.pipeline_mode<synchronous>, transform_indices = @transform_7, window_bounds = array<i64: 128, 64>}, {pipeline_mode = #tpu.pipeline_mode<synchronous>, transform_indices = @transform_8, window_bounds = array<i64: 1, 64>}, {pipeline_mode = #tpu.pipeline_mode<synchronous>, transform_indices = @transform_9, window_bounds = array<i64: 128, 64>}, {pipeline_mode = #tpu.pipeline_mode<synchronous>, transform_indices = @transform_10, window_bounds = array<i64: 1, 64>}, {pipeline_mode = #tpu.pipeline_mode<synchronous>, transform_indices = @transform_11, window_bounds = array<i64: 128, 64>}, {pipeline_mode = #tpu.pipeline_mode<synchronous>, transform_indices = @transform_12, window_bounds = array<i64: 1, 64>}, {pipeline_mode = #tpu.pipeline_mode<synchronous>, transform_indices = @transform_13, window_bounds = array<i64: 128, 64>}, {pipeline_mode = #tpu.pipeline_mode<synchronous>, transform_indices = @transform_14, window_bounds = array<i64: 1, 64>}, {pipeline_mode = #tpu.pipeline_mode<synchronous>, transform_indices = @transform_15, window_bounds = array<i64: 64, 2>}, {pipeline_mode = #tpu.pipeline_mode<synchronous>, transform_indices = @transform_16, window_bounds = array<i64: 1, 1>}, {transform_indices = @transform_17, window_bounds = array<i64: 16, 2>}]} {
    %c0 = arith.constant 0 : index
    %c0_0 = arith.constant 0 : index
    %0 = vector.load %arg1[%c0, %c0_0] : memref<16x8xf32, #tpu.memory_space<vmem>>, vector<16x8xf32>
    %c1_i32 = arith.constant 1 : i32
    %1 = tpu.dynamic_rotate %0 by %c1_i32 dim 0 : vector<16x8xf32>, i32 -> vector<16x8xf32>
    %2 = tpu.iota {dimensions = array<i32: 0>} : vector<16x8xi32>
    %c16_i32 = arith.constant 16 : i32
    %c0_i32 = arith.constant 0 : i32
    %3 = arith.cmpi eq, %c16_i32, %c0_i32 : i32
    %c1_i32_1 = arith.constant 1 : i32
    %4 = arith.select %3, %c1_i32_1, %c16_i32 : i32
    %5 = vector.broadcast %4 : i32 to vector<16x8xi32>
    %6 = arith.remsi %2, %5 : vector<16x8xi32>
    %c0_i32_2 = arith.constant 0 : i32
    %7 = vector.broadcast %c0_i32_2 : i32 to vector<16x8xi32>
    %8 = arith.cmpi ne, %6, %7 : vector<16x8xi32>
    %c0_i32_3 = arith.constant 0 : i32
    %9 = vector.broadcast %c0_i32_3 : i32 to vector<16x8xi32>
    %10 = arith.cmpi slt, %6, %9 : vector<16x8xi32>
    %c0_i32_4 = arith.constant 0 : i32
    %11 = arith.cmpi slt, %4, %c0_i32_4 : i32
    %12 = vector.broadcast %11 : i1 to vector<16x8xi1>
    %13 = vector.broadcast %12 : vector<16x8xi1> to vector<16x8xi1>
    %14 = arith.xori %10, %13 : vector<16x8xi1>
    %15 = arith.andi %14, %8 : vector<16x8xi1>
    %16 = vector.broadcast %4 : i32 to vector<16x8xi32>
    %17 = arith.addi %6, %16 : vector<16x8xi32>
    %18 = arith.select %15, %17, %6 : vector<16x8xi1>, vector<16x8xi32>
    %c1_i32_5 = arith.constant 1 : i32
    %19 = vector.broadcast %c1_i32_5 : i32 to vector<16x8xi32>
    %20 = arith.cmpi sge, %18, %19 : vector<16x8xi32>
    %cst = arith.constant 0.000000e+00 : f32
    %21 = vector.broadcast %cst : f32 to vector<16x8xf32>
    %22 = arith.select %20, %1, %21 : vector<16x8xi1>, vector<16x8xf32>
    %c0_6 = arith.constant 0 : index
    %c0_7 = arith.constant 0 : index
    %23 = vector.load %arg2[%c0_6, %c0_7] : memref<16x64xf32, #tpu.memory_space<vmem>>, vector<8x64xf32>
    %cst_8 = arith.constant dense<0.000000e+00> : vector<16x64xf32>
    %24 = tpu.matmul %22, %23, %cst_8 {dimension_numbers = #tpu.dot_dimension_numbers<[1], [0], [0], [1], [0, 0, 1, 1], [], []>} : vector<16x8xf32>, vector<8x64xf32>, vector<16x64xf32> -> vector<16x64xf32>
    %c8 = arith.constant 8 : index
    %c0_9 = arith.constant 0 : index
    %25 = vector.load %arg2[%c8, %c0_9] : memref<16x64xf32, #tpu.memory_space<vmem>>, vector<8x64xf32>
    %cst_10 = arith.constant dense<0.000000e+00> : vector<16x64xf32>
    %26 = tpu.matmul %0, %25, %cst_10 {dimension_numbers = #tpu.dot_dimension_numbers<[1], [0], [0], [1], [0, 0, 1, 1], [], []>} : vector<16x8xf32>, vector<8x64xf32>, vector<16x64xf32> -> vector<16x64xf32>
    %27 = arith.addf %24, %26 : vector<16x64xf32>
    %c0_11 = arith.constant 0 : index
    %c0_12 = arith.constant 0 : index
    %28 = vector.load %arg3[%c0_11, %c0_12] : memref<1x64xf32, #tpu.memory_space<vmem>>, vector<1x64xf32>
    %29 = vector.broadcast %28 : vector<1x64xf32> to vector<16x64xf32>
    %30 = arith.addf %27, %29 : vector<16x64xf32>
    %cst_13 = arith.constant 0.000000e+00 : f32
    %31 = vector.broadcast %cst_13 : f32 to vector<16x64xf32>
    %32 = arith.maximumf %30, %31 : vector<16x64xf32>
    %c1_i32_14 = arith.constant 1 : i32
    %33 = tpu.dynamic_rotate %32 by %c1_i32_14 dim 0 : vector<16x64xf32>, i32 -> vector<16x64xf32>
    %34 = tpu.iota {dimensions = array<i32: 0>} : vector<16x64xi32>
    %c16_i32_15 = arith.constant 16 : i32
    %c0_i32_16 = arith.constant 0 : i32
    %35 = arith.cmpi eq, %c16_i32_15, %c0_i32_16 : i32
    %c1_i32_17 = arith.constant 1 : i32
    %36 = arith.select %35, %c1_i32_17, %c16_i32_15 : i32
    %37 = vector.broadcast %36 : i32 to vector<16x64xi32>
    %38 = arith.remsi %34, %37 : vector<16x64xi32>
    %c0_i32_18 = arith.constant 0 : i32
    %39 = vector.broadcast %c0_i32_18 : i32 to vector<16x64xi32>
    %40 = arith.cmpi ne, %38, %39 : vector<16x64xi32>
    %c0_i32_19 = arith.constant 0 : i32
    %41 = vector.broadcast %c0_i32_19 : i32 to vector<16x64xi32>
    %42 = arith.cmpi slt, %38, %41 : vector<16x64xi32>
    %c0_i32_20 = arith.constant 0 : i32
    %43 = arith.cmpi slt, %36, %c0_i32_20 : i32
    %44 = vector.broadcast %43 : i1 to vector<16x64xi1>
    %45 = vector.broadcast %44 : vector<16x64xi1> to vector<16x64xi1>
    %46 = arith.xori %42, %45 : vector<16x64xi1>
    %47 = arith.andi %46, %40 : vector<16x64xi1>
    %48 = vector.broadcast %36 : i32 to vector<16x64xi32>
    %49 = arith.addi %38, %48 : vector<16x64xi32>
    %50 = arith.select %47, %49, %38 : vector<16x64xi1>, vector<16x64xi32>
    %c1_i32_21 = arith.constant 1 : i32
    %51 = vector.broadcast %c1_i32_21 : i32 to vector<16x64xi32>
    %52 = arith.cmpi sge, %50, %51 : vector<16x64xi32>
    %cst_22 = arith.constant 0.000000e+00 : f32
    %53 = vector.broadcast %cst_22 : f32 to vector<16x64xf32>
    %54 = arith.select %52, %33, %53 : vector<16x64xi1>, vector<16x64xf32>
    %c0_23 = arith.constant 0 : index
    %c0_24 = arith.constant 0 : index
    %55 = vector.load %arg4[%c0_23, %c0_24] : memref<128x64xf32, #tpu.memory_space<vmem>>, vector<64x64xf32>
    %cst_25 = arith.constant dense<0.000000e+00> : vector<16x64xf32>
    %56 = tpu.matmul %54, %55, %cst_25 {dimension_numbers = #tpu.dot_dimension_numbers<[1], [0], [0], [1], [0, 0, 1, 1], [], []>} : vector<16x64xf32>, vector<64x64xf32>, vector<16x64xf32> -> vector<16x64xf32>
    %c64 = arith.constant 64 : index
    %c0_26 = arith.constant 0 : index
    %57 = vector.load %arg4[%c64, %c0_26] : memref<128x64xf32, #tpu.memory_space<vmem>>, vector<64x64xf32>
    %cst_27 = arith.constant dense<0.000000e+00> : vector<16x64xf32>
    %58 = tpu.matmul %32, %57, %cst_27 {dimension_numbers = #tpu.dot_dimension_numbers<[1], [0], [0], [1], [0, 0, 1, 1], [], []>} : vector<16x64xf32>, vector<64x64xf32>, vector<16x64xf32> -> vector<16x64xf32>
    %59 = arith.addf %56, %58 : vector<16x64xf32>
    %c0_28 = arith.constant 0 : index
    %c0_29 = arith.constant 0 : index
    %60 = vector.load %arg5[%c0_28, %c0_29] : memref<1x64xf32, #tpu.memory_space<vmem>>, vector<1x64xf32>
    %61 = vector.broadcast %60 : vector<1x64xf32> to vector<16x64xf32>
    %62 = arith.addf %59, %61 : vector<16x64xf32>
    %cst_30 = arith.constant 0.000000e+00 : f32
    %63 = vector.broadcast %cst_30 : f32 to vector<16x64xf32>
    %64 = arith.maximumf %62, %63 : vector<16x64xf32>
    %c0_31 = arith.constant 0 : index
    %c0_32 = arith.constant 0 : index
    %65 = vector.load %arg6[%c0_31, %c0_32] : memref<8x64xf32, #tpu.memory_space<vmem>>, vector<8x64xf32>
    %cst_33 = arith.constant dense<0.000000e+00> : vector<16x64xf32>
    %66 = tpu.matmul %0, %65, %cst_33 {dimension_numbers = #tpu.dot_dimension_numbers<[1], [0], [0], [1], [0, 0, 1, 1], [], []>} : vector<16x8xf32>, vector<8x64xf32>, vector<16x64xf32> -> vector<16x64xf32>
    %c0_34 = arith.constant 0 : index
    %c0_35 = arith.constant 0 : index
    %67 = vector.load %arg7[%c0_34, %c0_35] : memref<1x64xf32, #tpu.memory_space<vmem>>, vector<1x64xf32>
    %68 = vector.broadcast %67 : vector<1x64xf32> to vector<16x64xf32>
    %69 = arith.addf %66, %68 : vector<16x64xf32>
    %70 = arith.addf %64, %69 : vector<16x64xf32>
    %cst_36 = arith.constant 0.000000e+00 : f32
    %71 = vector.broadcast %cst_36 : f32 to vector<16x64xf32>
    %72 = arith.maximumf %70, %71 : vector<16x64xf32>
    %c2_i32 = arith.constant 2 : i32
    %73 = tpu.dynamic_rotate %72 by %c2_i32 dim 0 : vector<16x64xf32>, i32 -> vector<16x64xf32>
    %c2_i32_37 = arith.constant 2 : i32
    %74 = vector.broadcast %c2_i32_37 : i32 to vector<16x64xi32>
    %75 = arith.cmpi sge, %50, %74 : vector<16x64xi32>
    %cst_38 = arith.constant 0.000000e+00 : f32
    %76 = vector.broadcast %cst_38 : f32 to vector<16x64xf32>
    %77 = arith.select %75, %73, %76 : vector<16x64xi1>, vector<16x64xf32>
    %c0_39 = arith.constant 0 : index
    %c0_40 = arith.constant 0 : index
    %78 = vector.load %arg8[%c0_39, %c0_40] : memref<128x64xf32, #tpu.memory_space<vmem>>, vector<64x64xf32>
    %cst_41 = arith.constant dense<0.000000e+00> : vector<16x64xf32>
    %79 = tpu.matmul %77, %78, %cst_41 {dimension_numbers = #tpu.dot_dimension_numbers<[1], [0], [0], [1], [0, 0, 1, 1], [], []>} : vector<16x64xf32>, vector<64x64xf32>, vector<16x64xf32> -> vector<16x64xf32>
    %c64_42 = arith.constant 64 : index
    %c0_43 = arith.constant 0 : index
    %80 = vector.load %arg8[%c64_42, %c0_43] : memref<128x64xf32, #tpu.memory_space<vmem>>, vector<64x64xf32>
    %cst_44 = arith.constant dense<0.000000e+00> : vector<16x64xf32>
    %81 = tpu.matmul %72, %80, %cst_44 {dimension_numbers = #tpu.dot_dimension_numbers<[1], [0], [0], [1], [0, 0, 1, 1], [], []>} : vector<16x64xf32>, vector<64x64xf32>, vector<16x64xf32> -> vector<16x64xf32>
    %82 = arith.addf %79, %81 : vector<16x64xf32>
    %c0_45 = arith.constant 0 : index
    %c0_46 = arith.constant 0 : index
    %83 = vector.load %arg9[%c0_45, %c0_46] : memref<1x64xf32, #tpu.memory_space<vmem>>, vector<1x64xf32>
    %84 = vector.broadcast %83 : vector<1x64xf32> to vector<16x64xf32>
    %85 = arith.addf %82, %84 : vector<16x64xf32>
    %cst_47 = arith.constant 0.000000e+00 : f32
    %86 = vector.broadcast %cst_47 : f32 to vector<16x64xf32>
    %87 = arith.maximumf %85, %86 : vector<16x64xf32>
    %c2_i32_48 = arith.constant 2 : i32
    %88 = tpu.dynamic_rotate %87 by %c2_i32_48 dim 0 : vector<16x64xf32>, i32 -> vector<16x64xf32>
    %cst_49 = arith.constant 0.000000e+00 : f32
    %89 = vector.broadcast %cst_49 : f32 to vector<16x64xf32>
    %90 = arith.select %75, %88, %89 : vector<16x64xi1>, vector<16x64xf32>
    %c0_50 = arith.constant 0 : index
    %c0_51 = arith.constant 0 : index
    %91 = vector.load %arg10[%c0_50, %c0_51] : memref<128x64xf32, #tpu.memory_space<vmem>>, vector<64x64xf32>
    %cst_52 = arith.constant dense<0.000000e+00> : vector<16x64xf32>
    %92 = tpu.matmul %90, %91, %cst_52 {dimension_numbers = #tpu.dot_dimension_numbers<[1], [0], [0], [1], [0, 0, 1, 1], [], []>} : vector<16x64xf32>, vector<64x64xf32>, vector<16x64xf32> -> vector<16x64xf32>
    %c64_53 = arith.constant 64 : index
    %c0_54 = arith.constant 0 : index
    %93 = vector.load %arg10[%c64_53, %c0_54] : memref<128x64xf32, #tpu.memory_space<vmem>>, vector<64x64xf32>
    %cst_55 = arith.constant dense<0.000000e+00> : vector<16x64xf32>
    %94 = tpu.matmul %87, %93, %cst_55 {dimension_numbers = #tpu.dot_dimension_numbers<[1], [0], [0], [1], [0, 0, 1, 1], [], []>} : vector<16x64xf32>, vector<64x64xf32>, vector<16x64xf32> -> vector<16x64xf32>
    %95 = arith.addf %92, %94 : vector<16x64xf32>
    %c0_56 = arith.constant 0 : index
    %c0_57 = arith.constant 0 : index
    %96 = vector.load %arg11[%c0_56, %c0_57] : memref<1x64xf32, #tpu.memory_space<vmem>>, vector<1x64xf32>
    %97 = vector.broadcast %96 : vector<1x64xf32> to vector<16x64xf32>
    %98 = arith.addf %95, %97 : vector<16x64xf32>
    %cst_58 = arith.constant 0.000000e+00 : f32
    %99 = vector.broadcast %cst_58 : f32 to vector<16x64xf32>
    %100 = arith.maximumf %98, %99 : vector<16x64xf32>
    %101 = arith.addf %100, %72 : vector<16x64xf32>
    %cst_59 = arith.constant 0.000000e+00 : f32
    %102 = vector.broadcast %cst_59 : f32 to vector<16x64xf32>
    %103 = arith.maximumf %101, %102 : vector<16x64xf32>
    %c4_i32 = arith.constant 4 : i32
    %104 = tpu.dynamic_rotate %103 by %c4_i32 dim 0 : vector<16x64xf32>, i32 -> vector<16x64xf32>
    %c4_i32_60 = arith.constant 4 : i32
    %105 = vector.broadcast %c4_i32_60 : i32 to vector<16x64xi32>
    %106 = arith.cmpi sge, %50, %105 : vector<16x64xi32>
    %cst_61 = arith.constant 0.000000e+00 : f32
    %107 = vector.broadcast %cst_61 : f32 to vector<16x64xf32>
    %108 = arith.select %106, %104, %107 : vector<16x64xi1>, vector<16x64xf32>
    %c0_62 = arith.constant 0 : index
    %c0_63 = arith.constant 0 : index
    %109 = vector.load %arg12[%c0_62, %c0_63] : memref<128x64xf32, #tpu.memory_space<vmem>>, vector<64x64xf32>
    %cst_64 = arith.constant dense<0.000000e+00> : vector<16x64xf32>
    %110 = tpu.matmul %108, %109, %cst_64 {dimension_numbers = #tpu.dot_dimension_numbers<[1], [0], [0], [1], [0, 0, 1, 1], [], []>} : vector<16x64xf32>, vector<64x64xf32>, vector<16x64xf32> -> vector<16x64xf32>
    %c64_65 = arith.constant 64 : index
    %c0_66 = arith.constant 0 : index
    %111 = vector.load %arg12[%c64_65, %c0_66] : memref<128x64xf32, #tpu.memory_space<vmem>>, vector<64x64xf32>
    %cst_67 = arith.constant dense<0.000000e+00> : vector<16x64xf32>
    %112 = tpu.matmul %103, %111, %cst_67 {dimension_numbers = #tpu.dot_dimension_numbers<[1], [0], [0], [1], [0, 0, 1, 1], [], []>} : vector<16x64xf32>, vector<64x64xf32>, vector<16x64xf32> -> vector<16x64xf32>
    %113 = arith.addf %110, %112 : vector<16x64xf32>
    %c0_68 = arith.constant 0 : index
    %c0_69 = arith.constant 0 : index
    %114 = vector.load %arg13[%c0_68, %c0_69] : memref<1x64xf32, #tpu.memory_space<vmem>>, vector<1x64xf32>
    %115 = vector.broadcast %114 : vector<1x64xf32> to vector<16x64xf32>
    %116 = arith.addf %113, %115 : vector<16x64xf32>
    %cst_70 = arith.constant 0.000000e+00 : f32
    %117 = vector.broadcast %cst_70 : f32 to vector<16x64xf32>
    %118 = arith.maximumf %116, %117 : vector<16x64xf32>
    %c4_i32_71 = arith.constant 4 : i32
    %119 = tpu.dynamic_rotate %118 by %c4_i32_71 dim 0 : vector<16x64xf32>, i32 -> vector<16x64xf32>
    %cst_72 = arith.constant 0.000000e+00 : f32
    %120 = vector.broadcast %cst_72 : f32 to vector<16x64xf32>
    %121 = arith.select %106, %119, %120 : vector<16x64xi1>, vector<16x64xf32>
    %c0_73 = arith.constant 0 : index
    %c0_74 = arith.constant 0 : index
    %122 = vector.load %arg14[%c0_73, %c0_74] : memref<128x64xf32, #tpu.memory_space<vmem>>, vector<64x64xf32>
    %cst_75 = arith.constant dense<0.000000e+00> : vector<16x64xf32>
    %123 = tpu.matmul %121, %122, %cst_75 {dimension_numbers = #tpu.dot_dimension_numbers<[1], [0], [0], [1], [0, 0, 1, 1], [], []>} : vector<16x64xf32>, vector<64x64xf32>, vector<16x64xf32> -> vector<16x64xf32>
    %c64_76 = arith.constant 64 : index
    %c0_77 = arith.constant 0 : index
    %124 = vector.load %arg14[%c64_76, %c0_77] : memref<128x64xf32, #tpu.memory_space<vmem>>, vector<64x64xf32>
    %cst_78 = arith.constant dense<0.000000e+00> : vector<16x64xf32>
    %125 = tpu.matmul %118, %124, %cst_78 {dimension_numbers = #tpu.dot_dimension_numbers<[1], [0], [0], [1], [0, 0, 1, 1], [], []>} : vector<16x64xf32>, vector<64x64xf32>, vector<16x64xf32> -> vector<16x64xf32>
    %126 = arith.addf %123, %125 : vector<16x64xf32>
    %c0_79 = arith.constant 0 : index
    %c0_80 = arith.constant 0 : index
    %127 = vector.load %arg15[%c0_79, %c0_80] : memref<1x64xf32, #tpu.memory_space<vmem>>, vector<1x64xf32>
    %128 = vector.broadcast %127 : vector<1x64xf32> to vector<16x64xf32>
    %129 = arith.addf %126, %128 : vector<16x64xf32>
    %cst_81 = arith.constant 0.000000e+00 : f32
    %130 = vector.broadcast %cst_81 : f32 to vector<16x64xf32>
    %131 = arith.maximumf %129, %130 : vector<16x64xf32>
    %132 = arith.addf %131, %103 : vector<16x64xf32>
    %cst_82 = arith.constant 0.000000e+00 : f32
    %133 = vector.broadcast %cst_82 : f32 to vector<16x64xf32>
    %134 = arith.maximumf %132, %133 : vector<16x64xf32>
    %c0_83 = arith.constant 0 : index
    %c0_84 = arith.constant 0 : index
    %135 = vector.load %arg16[%c0_83, %c0_84] : memref<64x2xf32, #tpu.memory_space<vmem>>, vector<64x2xf32>
    %cst_85 = arith.constant dense<0.000000e+00> : vector<16x2xf32>
    %136 = tpu.matmul %134, %135, %cst_85 {dimension_numbers = #tpu.dot_dimension_numbers<[1], [0], [0], [1], [0, 0, 1, 1], [], []>} : vector<16x64xf32>, vector<64x2xf32>, vector<16x2xf32> -> vector<16x2xf32>
    %c0_86 = arith.constant 0 : index
    %c0_87 = arith.constant 0 : index
    %137 = vector.load %arg17[%c0_86, %c0_87] : memref<1x1xf32, #tpu.memory_space<vmem>>, vector<1x1xf32>
    %138 = vector.broadcast %137 : vector<1x1xf32> to vector<16x2xf32>
    %139 = arith.addf %136, %138 : vector<16x2xf32>
    %140 = arith.negf %139 : vector<16x2xf32>
    %141 = math.exp %140 : vector<16x2xf32>
    %cst_88 = arith.constant 1.000000e+00 : f32
    %142 = vector.broadcast %cst_88 : f32 to vector<16x2xf32>
    %143 = arith.addf %142, %141 : vector<16x2xf32>
    %144 = arith.divf %142, %143 : vector<16x2xf32>
    %c0_89 = arith.constant 0 : index
    %c0_90 = arith.constant 0 : index
    %145 = vector.load %arg18[%c0_89, %c0_90] : memref<16x2xf32, #tpu.memory_space<vmem>>, vector<16x2xf32>
    tpu.vector_store %arg18[%c0_89, %c0_90], %144 {strides = array<i32>} : memref<16x2xf32, #tpu.memory_space<vmem>>, vector<16x2xf32>,
    return
  }
  func.func @transform_0(%arg0: i32) -> (i32, i32) {
    %c0_i32 = arith.constant 0 : i32
    %c0_i32_0 = arith.constant 0 : i32
    return %arg0, %c0_i32 : i32, i32
  }
  func.func @transform_1(%arg0: i32) -> (i32, i32) {
    %c0_i32 = arith.constant 0 : i32
    %c0_i32_0 = arith.constant 0 : i32
    %c0_i32_1 = arith.constant 0 : i32
    return %c0_i32, %c0_i32_0 : i32, i32
  }
  func.func @transform_2(%arg0: i32) -> (i32, i32) {
    %c0_i32 = arith.constant 0 : i32
    %c0_i32_0 = arith.constant 0 : i32
    %c0_i32_1 = arith.constant 0 : i32
    return %c0_i32, %c0_i32_0 : i32, i32
  }
  func.func @transform_3(%arg0: i32) -> (i32, i32) {
    %c0_i32 = arith.constant 0 : i32
    %c0_i32_0 = arith.constant 0 : i32
    %c0_i32_1 = arith.constant 0 : i32
    return %c0_i32, %c0_i32_0 : i32, i32
  }
  func.func @transform_4(%arg0: i32) -> (i32, i32) {
    %c0_i32 = arith.constant 0 : i32
    %c0_i32_0 = arith.constant 0 : i32
    %c0_i32_1 = arith.constant 0 : i32
    return %c0_i32, %c0_i32_0 : i32, i32
  }
  func.func @transform_5(%arg0: i32) -> (i32, i32) {
    %c0_i32 = arith.constant 0 : i32
    %c0_i32_0 = arith.constant 0 : i32
    %c0_i32_1 = arith.constant 0 : i32
    return %c0_i32, %c0_i32_0 : i32, i32
  }
  func.func @transform_6(%arg0: i32) -> (i32, i32) {
    %c0_i32 = arith.constant 0 : i32
    %c0_i32_0 = arith.constant 0 : i32
    %c0_i32_1 = arith.constant 0 : i32
    return %c0_i32, %c0_i32_0 : i32, i32
  }
  func.func @transform_7(%arg0: i32) -> (i32, i32) {
    %c0_i32 = arith.constant 0 : i32
    %c0_i32_0 = arith.constant 0 : i32
    %c0_i32_1 = arith.constant 0 : i32
    return %c0_i32, %c0_i32_0 : i32, i32
  }
  func.func @transform_8(%arg0: i32) -> (i32, i32) {
    %c0_i32 = arith.constant 0 : i32
    %c0_i32_0 = arith.constant 0 : i32
    %c0_i32_1 = arith.constant 0 : i32
    return %c0_i32, %c0_i32_0 : i32, i32
  }
  func.func @transform_9(%arg0: i32) -> (i32, i32) {
    %c0_i32 = arith.constant 0 : i32
    %c0_i32_0 = arith.constant 0 : i32
    %c0_i32_1 = arith.constant 0 : i32
    return %c0_i32, %c0_i32_0 : i32, i32
  }
  func.func @transform_10(%arg0: i32) -> (i32, i32) {
    %c0_i32 = arith.constant 0 : i32
    %c0_i32_0 = arith.constant 0 : i32
    %c0_i32_1 = arith.constant 0 : i32
    return %c0_i32, %c0_i32_0 : i32, i32
  }
  func.func @transform_11(%arg0: i32) -> (i32, i32) {
    %c0_i32 = arith.constant 0 : i32
    %c0_i32_0 = arith.constant 0 : i32
    %c0_i32_1 = arith.constant 0 : i32
    return %c0_i32, %c0_i32_0 : i32, i32
  }
  func.func @transform_12(%arg0: i32) -> (i32, i32) {
    %c0_i32 = arith.constant 0 : i32
    %c0_i32_0 = arith.constant 0 : i32
    %c0_i32_1 = arith.constant 0 : i32
    return %c0_i32, %c0_i32_0 : i32, i32
  }
  func.func @transform_13(%arg0: i32) -> (i32, i32) {
    %c0_i32 = arith.constant 0 : i32
    %c0_i32_0 = arith.constant 0 : i32
    %c0_i32_1 = arith.constant 0 : i32
    return %c0_i32, %c0_i32_0 : i32, i32
  }
  func.func @transform_14(%arg0: i32) -> (i32, i32) {
    %c0_i32 = arith.constant 0 : i32
    %c0_i32_0 = arith.constant 0 : i32
    %c0_i32_1 = arith.constant 0 : i32
    return %c0_i32, %c0_i32_0 : i32, i32
  }
  func.func @transform_15(%arg0: i32) -> (i32, i32) {
    %c0_i32 = arith.constant 0 : i32
    %c0_i32_0 = arith.constant 0 : i32
    %c0_i32_1 = arith.constant 0 : i32
    return %c0_i32, %c0_i32_0 : i32, i32
  }
  func.func @transform_16(%arg0: i32) -> (i32, i32) {
    %c0_i32 = arith.constant 0 : i32
    %c0_i32_0 = arith.constant 0 : i32
    %c0_i32_1 = arith.constant 0 : i32
    return %c0_i32, %c0_i32_0 : i32, i32
  }
  func.func @transform_17(%arg0: i32) -> (i32, i32) {
    %c0_i32 = arith.constant 0 : i32
    %c0_i32_0 = arith.constant 0 : i32
    return %arg0, %c0_i32 : i32, i32
  }
}

</mosaic_0001>

<llo_original>
// kernel: tpu_custom_call.1
$region0: #{tpu_custom_call.1}
  #allocation0 [shape = 'u32[]', space=smem, size = 0x4, offset = 0x4, fixed_abs, tag = 'smem constant byte address 0x4 - core index']
  #allocation1 [shape = 'u32[144,128]{1,0:T(1,128)}', space=vmem, size = 0x12000, scoped, tag = 'internal scratch']
  #allocation2 [shape = 'f32[1,1]{1,0:T(1,128)S(1)}', space=vmem, size = 0x200, scoped, tag = 'scoped memory for tpu_custom_call.1']
  %s0 = inlined_call_operand.vmem [shape: f32[16,8], index: 0, kind: input, shape index: {}]
  %s1 = inlined_call_operand.vmem [shape: f32[16,64], index: 1, kind: input, shape index: {}]
  %s2 = inlined_call_operand.vmem [shape: f32[1,64], index: 2, kind: input, shape index: {}]
  %s3 = inlined_call_operand.vmem [shape: f32[128,64], index: 3, kind: input, shape index: {}]
  %s4 = inlined_call_operand.vmem [shape: f32[1,64], index: 4, kind: input, shape index: {}]
  %s5 = inlined_call_operand.vmem [shape: f32[8,64], index: 5, kind: input, shape index: {}]
  %s6 = inlined_call_operand.vmem [shape: f32[1,64], index: 6, kind: input, shape index: {}]
  %s7 = inlined_call_operand.vmem [shape: f32[128,64], index: 7, kind: input, shape index: {}]
  %s8 = inlined_call_operand.vmem [shape: f32[1,64], index: 8, kind: input, shape index: {}]
  %s9 = inlined_call_operand.vmem [shape: f32[128,64], index: 9, kind: input, shape index: {}]
  %s10 = inlined_call_operand.vmem [shape: f32[1,64], index: 10, kind: input, shape index: {}]
  %s11 = inlined_call_operand.vmem [shape: f32[128,64], index: 11, kind: input, shape index: {}]
  %s12 = inlined_call_operand.vmem [shape: f32[1,64], index: 12, kind: input, shape index: {}]
  %s13 = inlined_call_operand.vmem [shape: f32[128,64], index: 13, kind: input, shape index: {}]
  %s14 = inlined_call_operand.vmem [shape: f32[1,64], index: 14, kind: input, shape index: {}]
  %s15 = inlined_call_operand.vmem [shape: f32[64,2], index: 15, kind: input, shape index: {}]
  %s16 = inlined_call_operand.<no memory space> [shape: f32[1,1], index: 16, kind: input, shape index: {}]
  %s17 = inlined_call_operand.vmem [shape: f32[16,2], index: 17, kind: output, shape index: {}]
  %s18 = sld [smem:[#allocation0]]
  $region78: #{tpu_custom_call.1} parent=0
    _
  %s20 = ssub.s32 1, %s18
  %s21 = scalar_select 0, %s20, %s18
  %v22 = vstv %s16
  %23 = vst [vmem:[#allocation2] sm:$0x1] %v22
  // Predicated region
  $region2: #{tpu_custom_call.1} parent=0 // pred_check
    _
  $region3: #{tpu_custom_call.1} parent=0 // pred_check_branch
    %25 = sbr.rel (0) target = $region5
  $region4: #{tpu_custom_call.1} parent=0 // pred_region
    _
  $region5: #{tpu_custom_call.1} parent=0 // pred_fallthru
    _
  // Predicated region
  $region6: #{tpu_custom_call.1} parent=0 // pred_check
    _
  $region7: #{tpu_custom_call.1} parent=0 // pred_check_branch
    %27 = sbr.rel (0) target = $region9
  $region8: #{tpu_custom_call.1} parent=0 // pred_region
    _
  $region9: #{tpu_custom_call.1} parent=0 // pred_fallthru
    _
  // Predicated region
  $region10: #{tpu_custom_call.1} parent=0 // pred_check
    _
  $region11: #{tpu_custom_call.1} parent=0 // pred_check_branch
    %29 = sbr.rel (0) target = $region13
  $region12: #{tpu_custom_call.1} parent=0 // pred_region
    _
  $region13: #{tpu_custom_call.1} parent=0 // pred_fallthru
    _
  // Predicated region
  $region14: #{tpu_custom_call.1} parent=0 // pred_check
    _
  $region15: #{tpu_custom_call.1} parent=0 // pred_check_branch
    %31 = sbr.rel (0) target = $region17
  $region16: #{tpu_custom_call.1} parent=0 // pred_region
    _
  $region17: #{tpu_custom_call.1} parent=0 // pred_fallthru
    _
  // Predicated region
  $region18: #{tpu_custom_call.1} parent=0 // pred_check
    _
  $region19: #{tpu_custom_call.1} parent=0 // pred_check_branch
    %33 = sbr.rel (0) target = $region21
  $region20: #{tpu_custom_call.1} parent=0 // pred_region
    _
  $region21: #{tpu_custom_call.1} parent=0 // pred_fallthru
    _
  // Predicated region
  $region22: #{tpu_custom_call.1} parent=0 // pred_check
    _
  $region23: #{tpu_custom_call.1} parent=0 // pred_check_branch
    %35 = sbr.rel (0) target = $region25
  $region24: #{tpu_custom_call.1} parent=0 // pred_region
    _
  $region25: #{tpu_custom_call.1} parent=0 // pred_fallthru
    _
  // Predicated region
  $region26: #{tpu_custom_call.1} parent=0 // pred_check
    _
  $region27: #{tpu_custom_call.1} parent=0 // pred_check_branch
    %37 = sbr.rel (0) target = $region29
  $region28: #{tpu_custom_call.1} parent=0 // pred_region
    _
  $region29: #{tpu_custom_call.1} parent=0 // pred_fallthru
    _
  // Predicated region
  $region30: #{tpu_custom_call.1} parent=0 // pred_check
    _
  $region31: #{tpu_custom_call.1} parent=0 // pred_check_branch
    %39 = sbr.rel (0) target = $region33
  $region32: #{tpu_custom_call.1} parent=0 // pred_region
    _
  $region33: #{tpu_custom_call.1} parent=0 // pred_fallthru
    _
  // Predicated region
  $region34: #{tpu_custom_call.1} parent=0 // pred_check
    _
  $region35: #{tpu_custom_call.1} parent=0 // pred_check_branch
    %41 = sbr.rel (0) target = $region37
  $region36: #{tpu_custom_call.1} parent=0 // pred_region
    _
  $region37: #{tpu_custom_call.1} parent=0 // pred_fallthru
    _
  // Predicated region
  $region38: #{tpu_custom_call.1} parent=0 // pred_check
    _
  $region39: #{tpu_custom_call.1} parent=0 // pred_check_branch
    %43 = sbr.rel (0) target = $region41
  $region40: #{tpu_custom_call.1} parent=0 // pred_region
    _
  $region41: #{tpu_custom_call.1} parent=0 // pred_fallthru
    _
  // Predicated region
  $region42: #{tpu_custom_call.1} parent=0 // pred_check
    _
  $region43: #{tpu_custom_call.1} parent=0 // pred_check_branch
    %45 = sbr.rel (0) target = $region45
  $region44: #{tpu_custom_call.1} parent=0 // pred_region
    _
  $region45: #{tpu_custom_call.1} parent=0 // pred_fallthru
    _
  // Predicated region
  $region46: #{tpu_custom_call.1} parent=0 // pred_check
    _
  $region47: #{tpu_custom_call.1} parent=0 // pred_check_branch
    %47 = sbr.rel (0) target = $region49
  $region48: #{tpu_custom_call.1} parent=0 // pred_region
    _
  $region49: #{tpu_custom_call.1} parent=0 // pred_fallthru
    _
  // Predicated region
  $region50: #{tpu_custom_call.1} parent=0 // pred_check
    _
  $region51: #{tpu_custom_call.1} parent=0 // pred_check_branch
    %49 = sbr.rel (0) target = $region53
  $region52: #{tpu_custom_call.1} parent=0 // pred_region
    _
  $region53: #{tpu_custom_call.1} parent=0 // pred_fallthru
    _
  // Predicated region
  $region54: #{tpu_custom_call.1} parent=0 // pred_check
    _
  $region55: #{tpu_custom_call.1} parent=0 // pred_check_branch
    %51 = sbr.rel (0) target = $region57
  $region56: #{tpu_custom_call.1} parent=0 // pred_region
    _
  $region57: #{tpu_custom_call.1} parent=0 // pred_fallthru
    _
  // Predicated region
  $region58: #{tpu_custom_call.1} parent=0 // pred_check
    _
  $region59: #{tpu_custom_call.1} parent=0 // pred_check_branch
    %53 = sbr.rel (0) target = $region61
  $region60: #{tpu_custom_call.1} parent=0 // pred_region
    _
  $region61: #{tpu_custom_call.1} parent=0 // pred_fallthru
    _
  // Predicated region
  $region62: #{tpu_custom_call.1} parent=0 // pred_check
    _
  $region63: #{tpu_custom_call.1} parent=0 // pred_check_branch
    %55 = sbr.rel (0) target = $region65
  $region64: #{tpu_custom_call.1} parent=0 // pred_region
    _
  $region65: #{tpu_custom_call.1} parent=0 // pred_fallthru
    _
  // Predicated region
  $region66: #{tpu_custom_call.1} parent=0 // pred_check
    _
  $region67: #{tpu_custom_call.1} parent=0 // pred_check_branch
    %57 = sbr.rel (0) target = $region69
  $region68: #{tpu_custom_call.1} parent=0 // pred_region
    _
  $region69: #{tpu_custom_call.1} parent=0 // pred_fallthru
    _
  %v58 = vld [vmem:[%s0] sm:$0xff]
  %v59 = vld [vmem:[%s0 + $0x8] sm:$0xff]
  %v60 = vrot.slane %v58, 7
  %v61 = vrot.slane %v59, 7
  %v62 = vlaneseq
  %v63 = vshrl.u32 %v62, 7
  %vm64 = vcmp.lt.s32.totalorder %v63, 1
  %v65 = vsel %vm64, %v60, %v61
  %v66 = vsel %vm64, %v61, %v60
  %v67 = vadd.s32 %v63, 8
  %vm68 = vcmp.lt.s32.totalorder %v63, 0
  %v69 = vsub.s32 0, %v63
  %v70 = vsel %vm68, %v69, %v63
  %v71 = vshrl.u32 %v70, 4
  %v72 = vand.u32 %v70, 15
  %v73 = vsub.s32 0, %v72
  %v74 = vsel %vm68, %v73, %v72
  %vm75 = vcmp.lt.s32.totalorder %v67, 0
  %v76 = vsub.s32 0, %v67
  %v77 = vsel %vm75, %v76, %v67
  %v78 = vshrl.u32 %v77, 4
  %v79 = vand.u32 %v77, 15
  %v80 = vsub.s32 0, %v79
  %v81 = vsel %vm75, %v80, %v79
  %vm82 = vcmp.ne.s32.totalorder %v74, 0
  %vm83 = vcmp.ne.s32.totalorder %v81, 0
  %vm84 = vcmp.lt.s32.totalorder %v74, 0
  %vm85 = vcmp.lt.s32.totalorder %v81, 0
  %vm86 = vmand %vm84, %vm82
  %vm87 = vmand %vm85, %vm83
  %v88 = vadd.s32 %v74, 16
  %v89 = vadd.s32 %v81, 16
  %v90 = vsel %vm86, %v88, %v74
  %v91 = vsel %vm87, %v89, %v81
  %vm92 = vcmp.ge.s32.totalorder %v90, 1
  %vm93 = vcmp.ge.s32.totalorder %v91, 1
  %v94 = vsel %vm92, %v66, 0.0
  %v95 = vsel %vm93, %v65, 0.0
  %v96 = vld [vmem:[%s1] sm:$0xff]
  %v97 = vld [vmem:[%s1 + $0x8] sm:$0xff]
  %vm98 = vcmask 64512
  %v100 = vsel %vm98, %v58, 0
  %v103 = vsel %vm98, %v59, 0
  %105 = vmatprep.subr.mxu0 0.0
  %106 = vmatpush1.msra.mxu0 %v97
  %107 = vmatprep.subr.mxu0 0.0
  %108 = vmatpush1.msra.mxu0 0.0
  %109 = vmatprep.subr.mxu0 0.0
  %110 = vmatpush1.msra.mxu0 0.0
  %111 = vmatprep.subr.mxu0 0.0
  %112 = vmatpush1.msra.mxu0 0.0
  %113 = vmatprep.subr.mxu0 0.0
  %114 = vmatpush1.msra.mxu0 0.0
  %115 = vmatprep.subr.mxu0 0.0
  %116 = vmatpush1.msra.mxu0 0.0
  %117 = vmatprep.subr.mxu0 0.0
  %118 = vmatpush1.msra.mxu0 0.0
  %119 = vmatprep.subr.mxu0 0.0
  %120 = vmatpush1.msra.mxu0 0.0
  %121 = vmatprep.subr.mxu0 0.0
  %122 = vmatpush1.msra.mxu0 0.0
  %123 = vmatprep.subr.mxu0 0.0
  %124 = vmatpush1.msra.mxu0 0.0
  %125 = vmatprep.subr.mxu0 0.0
  %126 = vmatpush1.msra.mxu0 0.0
  %127 = vmatprep.subr.mxu0 0.0
  %128 = vmatpush1.msra.mxu0 0.0
  %129 = vmatprep.subr.mxu0 0.0
  %130 = vmatpush1.msra.mxu0 0.0
  %131 = vmatprep.subr.mxu0 0.0
  %132 = vmatpush1.msra.mxu0 0.0
  %133 = vmatprep.subr.mxu0 0.0
  %134 = vmatpush1.msra.mxu0 0.0
  %135 = vmatprep.subr.mxu0 0.0
  %136 = vmatpush1.msra.mxu0 0.0
  %137 = vmatprep.subr.mxu0 0.0
  %138 = vmatpush1.msra.mxu0 0.0
  %139 = vmatprep.subr.mxu0 0.0
  %140 = vmatpush1.msra.mxu0 0.0
  %141 = vmatprep.subr.mxu0 0.0
  %142 = vmatpush1.msra.mxu0 0.0
  %143 = vmatprep.subr.mxu0 0.0
  %144 = vmatpush1.msra.mxu0 0.0
  %145 = vmatprep.subr.mxu0 0.0
  %146 = vmatpush1.msra.mxu0 0.0
  %147 = vmatprep.subr.mxu0 0.0
  %148 = vmatpush1.msra.mxu0 0.0
  %149 = vmatprep.subr.mxu0 0.0
  %150 = vmatpush1.msra.mxu0 0.0
  %151 = vmatprep.subr.mxu0 0.0
  %152 = vmatpush1.msra.mxu0 0.0
  %153 = vmatprep.subr.mxu0 0.0
  %154 = vmatpush1.msra.mxu0 0.0
  %155 = vmatprep.subr.mxu0 0.0
  %156 = vmatpush1.msra.mxu0 0.0
  %157 = vmatprep.subr.mxu0 0.0
  %158 = vmatpush1.msra.mxu0 0.0
  %159 = vmatprep.subr.mxu0 0.0
  %160 = vmatpush1.msra.mxu0 0.0
  %161 = vmatprep.subr.mxu0 0.0
  %162 = vmatpush1.msra.mxu0 0.0
  %163 = vmatprep.subr.mxu0 0.0
  %164 = vmatpush1.msra.mxu0 0.0
  %165 = vmatprep.subr.mxu0 0.0
  %166 = vmatpush1.msra.mxu0 0.0
  %167 = vmatprep.subr.mxu0 0.0
  %168 = vmatpush1.msra.mxu0 0.0
  %169 = vmatprep.mubr.f32.mxu0 0.0
  %170 = vmatmul.mubr.f32.gmra.mrb[0].mxu0 %v100
  %v171 = vpop.f32.mrb[0].mxu0
  %v172 = vadd.f32 0.0, %v171
  %v173 = vpop.f32.mrb[0].mxu0
  %174 = vmatprep.mubr.f32.mxu0 0.0
  %175 = vmatmul.mubr.f32.gmra.mrb[0].mxu0 %v103
  %v176 = vpop.f32.mrb[0].mxu0
  %v177 = vadd.f32 0.0, %v176
  %v178 = vpop.f32.mrb[0].mxu0
  %179 = vdwg.mxu0
  %v181 = vsel %vm98, %v94, 0
  %v184 = vsel %vm98, %v95, 0
  %186 = vmatprep.subr.mxu0 0.0
  %187 = vmatpush1.msra.mxu0 %v96
  %188 = vmatprep.subr.mxu0 0.0
  %189 = vmatpush1.msra.mxu0 0.0
  %190 = vmatprep.subr.mxu0 0.0
  %191 = vmatpush1.msra.mxu0 0.0
  %192 = vmatprep.subr.mxu0 0.0
  %193 = vmatpush1.msra.mxu0 0.0
  %194 = vmatprep.subr.mxu0 0.0
  %195 = vmatpush1.msra.mxu0 0.0
  %196 = vmatprep.subr.mxu0 0.0
  %197 = vmatpush1.msra.mxu0 0.0
  %198 = vmatprep.subr.mxu0 0.0
  %199 = vmatpush1.msra.mxu0 0.0
  %200 = vmatprep.subr.mxu0 0.0
  %201 = vmatpush1.msra.mxu0 0.0
  %202 = vmatprep.subr.mxu0 0.0
  %203 = vmatpush1.msra.mxu0 0.0
  %204 = vmatprep.subr.mxu0 0.0
  %205 = vmatpush1.msra.mxu0 0.0
  %206 = vmatprep.subr.mxu0 0.0
  %207 = vmatpush1.msra.mxu0 0.0
  %208 = vmatprep.subr.mxu0 0.0
  %209 = vmatpush1.msra.mxu0 0.0
  %210 = vmatprep.subr.mxu0 0.0
  %211 = vmatpush1.msra.mxu0 0.0
  %212 = vmatprep.subr.mxu0 0.0
  %213 = vmatpush1.msra.mxu0 0.0
  %214 = vmatprep.subr.mxu0 0.0
  %215 = vmatpush1.msra.mxu0 0.0
  %216 = vmatprep.subr.mxu0 0.0
  %217 = vmatpush1.msra.mxu0 0.0
  %218 = vmatprep.subr.mxu0 0.0
  %219 = vmatpush1.msra.mxu0 0.0
  %220 = vmatprep.subr.mxu0 0.0
  %221 = vmatpush1.msra.mxu0 0.0
  %222 = vmatprep.subr.mxu0 0.0
  %223 = vmatpush1.msra.mxu0 0.0
  %224 = vmatprep.subr.mxu0 0.0
  %225 = vmatpush1.msra.mxu0 0.0
  %226 = vmatprep.subr.mxu0 0.0
  %227 = vmatpush1.msra.mxu0 0.0
  %228 = vmatprep.subr.mxu0 0.0
  %229 = vmatpush1.msra.mxu0 0.0
  %230 = vmatprep.subr.mxu0 0.0
  %231 = vmatpush1.msra.mxu0 0.0
  %232 = vmatprep.subr.mxu0 0.0
  %233 = vmatpush1.msra.mxu0 0.0
  %234 = vmatprep.subr.mxu0 0.0
  %235 = vmatpush1.msra.mxu0 0.0
  %236 = vmatprep.subr.mxu0 0.0
  %237 = vmatpush1.msra.mxu0 0.0
  %238 = vmatprep.subr.mxu0 0.0
  %239 = vmatpush1.msra.mxu0 0.0
  %240 = vmatprep.subr.mxu0 0.0
  %241 = vmatpush1.msra.mxu0 0.0
  %242 = vmatprep.subr.mxu0 0.0
  %243 = vmatpush1.msra.mxu0 0.0
  %244 = vmatprep.subr.mxu0 0.0
  %245 = vmatpush1.msra.mxu0 0.0
  %246 = vmatprep.subr.mxu0 0.0
  %247 = vmatpush1.msra.mxu0 0.0
  %248 = vmatprep.subr.mxu0 0.0
  %249 = vmatpush1.msra.mxu0 0.0
  %250 = vmatprep.mubr.f32.mxu0 0.0
  %251 = vmatmul.mubr.f32.gmra.mrb[0].mxu0 %v181
  %v252 = vpop.f32.mrb[0].mxu0
  %v253 = vadd.f32 %v172, %v252
  %v254 = vpop.f32.mrb[0].mxu0
  %255 = vmatprep.mubr.f32.mxu0 0.0
  %256 = vmatmul.mubr.f32.gmra.mrb[0].mxu0 %v184
  %v257 = vpop.f32.mrb[0].mxu0
  %v258 = vadd.f32 %v177, %v257
  %v259 = vpop.f32.mrb[0].mxu0
  %260 = vdwg.mxu0
  %v261 = vld [vmem:[%s2] sm:$0x1]
  %v263 = vlaneseq
  %v264 = vshrl.u32 %v263, 7
  %v265 = vsub.s32 0, %v264
  %v266 = vrot.slane %v261, %v265
  %v268 = vadd.f32 %v253, %v266
  %v269 = vadd.f32 %v258, %v266
  %v270 = vmax.f32 %v268, 0.0
  %v271 = vmax.f32 %v269, 0.0
  %v272 = vrot.slane %v270, 7
  %v273 = vrot.slane %v271, 7
  %v274 = vsel %vm64, %v272, %v273
  %v275 = vsel %vm64, %v273, %v272
  %v276 = vsel %vm92, %v275, 0.0
  %v277 = vsel %vm93, %v274, 0.0
  %v278 = vld [vmem:[%s3] sm:$0xff]
  %v279 = vld [vmem:[%s3 + $0x8] sm:$0xff]
  %v280 = vld [vmem:[%s3 + $0x10] sm:$0xff]
  %v281 = vld [vmem:[%s3 + $0x18] sm:$0xff]
  %v282 = vld [vmem:[%s3 + $0x20] sm:$0xff]
  %v283 = vld [vmem:[%s3 + $0x28] sm:$0xff]
  %v284 = vld [vmem:[%s3 + $0x30] sm:$0xff]
  %v285 = vld [vmem:[%s3 + $0x38] sm:$0xff]
  %v286 = vld [vmem:[%s3 + $0x40] sm:$0xff]
  %v287 = vld [vmem:[%s3 + $0x48] sm:$0xff]
  %v288 = vld [vmem:[%s3 + $0x50] sm:$0xff]
  %v289 = vld [vmem:[%s3 + $0x58] sm:$0xff]
  %v290 = vld [vmem:[%s3 + $0x60] sm:$0xff]
  %v291 = vld [vmem:[%s3 + $0x68] sm:$0xff]
  %v292 = vld [vmem:[%s3 + $0x70] sm:$0xff]
  %v293 = vld [vmem:[%s3 + $0x78] sm:$0xff]
  %vm294 = vcmask 523264
  %v296 = vsel %vm294, %v270, 0
  %v299 = vsel %vm294, %v271, 0
  %301 = vmatprep.subr.mxu0 0.0
  %302 = vmatpush1.msra.mxu0 %v286
  %303 = vmatprep.subr.mxu0 0.0
  %304 = vmatpush1.msra.mxu0 %v287
  %305 = vmatprep.subr.mxu0 0.0
  %306 = vmatpush1.msra.mxu0 %v288
  %307 = vmatprep.subr.mxu0 0.0
  %308 = vmatpush1.msra.mxu0 %v289
  %309 = vmatprep.subr.mxu0 0.0
  %310 = vmatpush1.msra.mxu0 %v290
  %311 = vmatprep.subr.mxu0 0.0
  %312 = vmatpush1.msra.mxu0 %v291
  %313 = vmatprep.subr.mxu0 0.0
  %314 = vmatpush1.msra.mxu0 %v292
  %315 = vmatprep.subr.mxu0 0.0
  %316 = vmatpush1.msra.mxu0 %v293
  %317 = vmatprep.subr.mxu0 0.0
  %318 = vmatpush1.msra.mxu0 0.0
  %319 = vmatprep.subr.mxu0 0.0
  %320 = vmatpush1.msra.mxu0 0.0
  %321 = vmatprep.subr.mxu0 0.0
  %322 = vmatpush1.msra.mxu0 0.0
  %323 = vmatprep.subr.mxu0 0.0
  %324 = vmatpush1.msra.mxu0 0.0
  %325 = vmatprep.subr.mxu0 0.0
  %326 = vmatpush1.msra.mxu0 0.0
  %327 = vmatprep.subr.mxu0 0.0
  %328 = vmatpush1.msra.mxu0 0.0
  %329 = vmatprep.subr.mxu0 0.0
  %330 = vmatpush1.msra.mxu0 0.0
  %331 = vmatprep.subr.mxu0 0.0
  %332 = vmatpush1.msra.mxu0 0.0
  %333 = vmatprep.subr.mxu0 0.0
  %334 = vmatpush1.msra.mxu0 0.0
  %335 = vmatprep.subr.mxu0 0.0
  %336 = vmatpush1.msra.mxu0 0.0
  %337 = vmatprep.subr.mxu0 0.0
  %338 = vmatpush1.msra.mxu0 0.0
  %339 = vmatprep.subr.mxu0 0.0
  %340 = vmatpush1.msra.mxu0 0.0
  %341 = vmatprep.subr.mxu0 0.0
  %342 = vmatpush1.msra.mxu0 0.0
  %343 = vmatprep.subr.mxu0 0.0
  %344 = vmatpush1.msra.mxu0 0.0
  %345 = vmatprep.subr.mxu0 0.0
  %346 = vmatpush1.msra.mxu0 0.0
  %347 = vmatprep.subr.mxu0 0.0
  %348 = vmatpush1.msra.mxu0 0.0
  %349 = vmatprep.subr.mxu0 0.0
  %350 = vmatpush1.msra.mxu0 0.0
  %351 = vmatprep.subr.mxu0 0.0
  %352 = vmatpush1.msra.mxu0 0.0
  %353 = vmatprep.subr.mxu0 0.0
  %354 = vmatpush1.msra.mxu0 0.0
  %355 = vmatprep.subr.mxu0 0.0
  %356 = vmatpush1.msra.mxu0 0.0
  %357 = vmatprep.subr.mxu0 0.0
  %358 = vmatpush1.msra.mxu0 0.0
  %359 = vmatprep.subr.mxu0 0.0
  %360 = vmatpush1.msra.mxu0 0.0
  %361 = vmatprep.subr.mxu0 0.0
  %362 = vmatpush1.msra.mxu0 0.0
  %363 = vmatprep.subr.mxu0 0.0
  %364 = vmatpush1.msra.mxu0 0.0
  %365 = vmatprep.mubr.f32.mxu0 0.0
  %366 = vmatmul.mubr.f32.gmra.mrb[0].mxu0 %v296
  %v367 = vpop.f32.mrb[0].mxu0
  %v368 = vadd.f32 0.0, %v367
  %v369 = vpop.f32.mrb[0].mxu0
  %370 = vmatprep.mubr.f32.mxu0 0.0
  %371 = vmatmul.mubr.f32.gmra.mrb[0].mxu0 %v299
  %v372 = vpop.f32.mrb[0].mxu0
  %v373 = vadd.f32 0.0, %v372
  %v374 = vpop.f32.mrb[0].mxu0
  %375 = vdwg.mxu0
  %v377 = vsel %vm294, %v276, 0
  %v380 = vsel %vm294, %v277, 0
  %382 = vmatprep.subr.mxu0 0.0
  %383 = vmatpush1.msra.mxu0 %v278
  %384 = vmatprep.subr.mxu0 0.0
  %385 = vmatpush1.msra.mxu0 %v279
  %386 = vmatprep.subr.mxu0 0.0
  %387 = vmatpush1.msra.mxu0 %v280
  %388 = vmatprep.subr.mxu0 0.0
  %389 = vmatpush1.msra.mxu0 %v281
  %390 = vmatprep.subr.mxu0 0.0
  %391 = vmatpush1.msra.mxu0 %v282
  %392 = vmatprep.subr.mxu0 0.0
  %393 = vmatpush1.msra.mxu0 %v283
  %394 = vmatprep.subr.mxu0 0.0
  %395 = vmatpush1.msra.mxu0 %v284
  %396 = vmatprep.subr.mxu0 0.0
  %397 = vmatpush1.msra.mxu0 %v285
  %398 = vmatprep.subr.mxu0 0.0
  %399 = vmatpush1.msra.mxu0 0.0
  %400 = vmatprep.subr.mxu0 0.0
  %401 = vmatpush1.msra.mxu0 0.0
  %402 = vmatprep.subr.mxu0 0.0
  %403 = vmatpush1.msra.mxu0 0.0
  %404 = vmatprep.subr.mxu0 0.0
  %405 = vmatpush1.msra.mxu0 0.0
  %406 = vmatprep.subr.mxu0 0.0
  %407 = vmatpush1.msra.mxu0 0.0
  %408 = vmatprep.subr.mxu0 0.0
  %409 = vmatpush1.msra.mxu0 0.0
  %410 = vmatprep.subr.mxu0 0.0
  %411 = vmatpush1.msra.mxu0 0.0
  %412 = vmatprep.subr.mxu0 0.0
  %413 = vmatpush1.msra.mxu0 0.0
  %414 = vmatprep.subr.mxu0 0.0
  %415 = vmatpush1.msra.mxu0 0.0
  %416 = vmatprep.subr.mxu0 0.0
  %417 = vmatpush1.msra.mxu0 0.0
  %418 = vmatprep.subr.mxu0 0.0
  %419 = vmatpush1.msra.mxu0 0.0
  %420 = vmatprep.subr.mxu0 0.0
  %421 = vmatpush1.msra.mxu0 0.0
  %422 = vmatprep.subr.mxu0 0.0
  %423 = vmatpush1.msra.mxu0 0.0
  %424 = vmatprep.subr.mxu0 0.0
  %425 = vmatpush1.msra.mxu0 0.0
  %426 = vmatprep.subr.mxu0 0.0
  %427 = vmatpush1.msra.mxu0 0.0
  %428 = vmatprep.subr.mxu0 0.0
  %429 = vmatpush1.msra.mxu0 0.0
  %430 = vmatprep.subr.mxu0 0.0
  %431 = vmatpush1.msra.mxu0 0.0
  %432 = vmatprep.subr.mxu0 0.0
  %433 = vmatpush1.msra.mxu0 0.0
  %434 = vmatprep.subr.mxu0 0.0
  %435 = vmatpush1.msra.mxu0 0.0
  %436 = vmatprep.subr.mxu0 0.0
  %437 = vmatpush1.msra.mxu0 0.0
  %438 = vmatprep.subr.mxu0 0.0
  %439 = vmatpush1.msra.mxu0 0.0
  %440 = vmatprep.subr.mxu0 0.0
  %441 = vmatpush1.msra.mxu0 0.0
  %442 = vmatprep.subr.mxu0 0.0
  %443 = vmatpush1.msra.mxu0 0.0
  %444 = vmatprep.subr.mxu0 0.0
  %445 = vmatpush1.msra.mxu0 0.0
  %446 = vmatprep.mubr.f32.mxu0 0.0
  %447 = vmatmul.mubr.f32.gmra.mrb[0].mxu0 %v377
  %v448 = vpop.f32.mrb[0].mxu0
  %v449 = vadd.f32 %v368, %v448
  %v450 = vpop.f32.mrb[0].mxu0
  %451 = vmatprep.mubr.f32.mxu0 0.0
  %452 = vmatmul.mubr.f32.gmra.mrb[0].mxu0 %v380
  %v453 = vpop.f32.mrb[0].mxu0
  %v454 = vadd.f32 %v373, %v453
  %v455 = vpop.f32.mrb[0].mxu0
  %456 = vdwg.mxu0
  %v457 = vld [vmem:[%s4] sm:$0x1]
  %v459 = vlaneseq
  %v460 = vshrl.u32 %v459, 7
  %v461 = vsub.s32 0, %v460
  %v462 = vrot.slane %v457, %v461
  %v464 = vadd.f32 %v449, %v462
  %v465 = vadd.f32 %v454, %v462
  %v466 = vmax.f32 %v464, 0.0
  %v467 = vmax.f32 %v465, 0.0
  %v468 = vld [vmem:[%s5] sm:$0xff]
  %v469 = vld [vmem:[%s6] sm:$0x1]
  %v471 = vlaneseq
  %v472 = vshrl.u32 %v471, 7
  %v473 = vsub.s32 0, %v472
  %v474 = vrot.slane %v469, %v473
  %476 = vmatprep.subr.mxu0 0.0
  %477 = vmatpush1.msra.mxu0 %v468
  %478 = vmatprep.subr.mxu0 0.0
  %479 = vmatpush1.msra.mxu0 0.0
  %480 = vmatprep.subr.mxu0 0.0
  %481 = vmatpush1.msra.mxu0 0.0
  %482 = vmatprep.subr.mxu0 0.0
  %483 = vmatpush1.msra.mxu0 0.0
  %484 = vmatprep.subr.mxu0 0.0
  %485 = vmatpush1.msra.mxu0 0.0
  %486 = vmatprep.subr.mxu0 0.0
  %487 = vmatpush1.msra.mxu0 0.0
  %488 = vmatprep.subr.mxu0 0.0
  %489 = vmatpush1.msra.mxu0 0.0
  %490 = vmatprep.subr.mxu0 0.0
  %491 = vmatpush1.msra.mxu0 0.0
  %492 = vmatprep.subr.mxu0 0.0
  %493 = vmatpush1.msra.mxu0 0.0
  %494 = vmatprep.subr.mxu0 0.0
  %495 = vmatpush1.msra.mxu0 0.0
  %496 = vmatprep.subr.mxu0 0.0
  %497 = vmatpush1.msra.mxu0 0.0
  %498 = vmatprep.subr.mxu0 0.0
  %499 = vmatpush1.msra.mxu0 0.0
  %500 = vmatprep.subr.mxu0 0.0
  %501 = vmatpush1.msra.mxu0 0.0
  %502 = vmatprep.subr.mxu0 0.0
  %503 = vmatpush1.msra.mxu0 0.0
  %504 = vmatprep.subr.mxu0 0.0
  %505 = vmatpush1.msra.mxu0 0.0
  %506 = vmatprep.subr.mxu0 0.0
  %507 = vmatpush1.msra.mxu0 0.0
  %508 = vmatprep.subr.mxu0 0.0
  %509 = vmatpush1.msra.mxu0 0.0
  %510 = vmatprep.subr.mxu0 0.0
  %511 = vmatpush1.msra.mxu0 0.0
  %512 = vmatprep.subr.mxu0 0.0
  %513 = vmatpush1.msra.mxu0 0.0
  %514 = vmatprep.subr.mxu0 0.0
  %515 = vmatpush1.msra.mxu0 0.0
  %516 = vmatprep.subr.mxu0 0.0
  %517 = vmatpush1.msra.mxu0 0.0
  %518 = vmatprep.subr.mxu0 0.0
  %519 = vmatpush1.msra.mxu0 0.0
  %520 = vmatprep.subr.mxu0 0.0
  %521 = vmatpush1.msra.mxu0 0.0
  %522 = vmatprep.subr.mxu0 0.0
  %523 = vmatpush1.msra.mxu0 0.0
  %524 = vmatprep.subr.mxu0 0.0
  %525 = vmatpush1.msra.mxu0 0.0
  %526 = vmatprep.subr.mxu0 0.0
  %527 = vmatpush1.msra.mxu0 0.0
  %528 = vmatprep.subr.mxu0 0.0
  %529 = vmatpush1.msra.mxu0 0.0
  %530 = vmatprep.subr.mxu0 0.0
  %531 = vmatpush1.msra.mxu0 0.0
  %532 = vmatprep.subr.mxu0 0.0
  %533 = vmatpush1.msra.mxu0 0.0
  %534 = vmatprep.subr.mxu0 0.0
  %535 = vmatpush1.msra.mxu0 0.0
  %536 = vmatprep.subr.mxu0 0.0
  %537 = vmatpush1.msra.mxu0 0.0
  %538 = vmatprep.subr.mxu0 0.0
  %539 = vmatpush1.msra.mxu0 0.0
  %540 = vmatprep.mubr.f32.mxu0 0.0
  %541 = vmatmul.mubr.f32.gmra.mrb[0].mxu0 %v100
  %v542 = vpop.f32.mrb[0].mxu0
  %v543 = vadd.f32 %v474, %v542
  %v544 = vpop.f32.mrb[0].mxu0
  %545 = vmatprep.mubr.f32.mxu0 0.0
  %546 = vmatmul.mubr.f32.gmra.mrb[0].mxu0 %v103
  %v547 = vpop.f32.mrb[0].mxu0
  %v548 = vadd.f32 %v474, %v547
  %v549 = vpop.f32.mrb[0].mxu0
  %550 = vdwg.mxu0
  %v551 = vadd.f32 %v466, %v543
  %v552 = vadd.f32 %v467, %v548
  %v553 = vmax.f32 %v551, 0.0
  %v554 = vmax.f32 %v552, 0.0
  %v555 = vrot.slane %v553, 6
  %v556 = vrot.slane %v554, 6
  %vm557 = vcmp.lt.s32.totalorder %v63, 2
  %v558 = vsel %vm557, %v555, %v556
  %v559 = vsel %vm557, %v556, %v555
  %vm560 = vcmp.ge.s32.totalorder %v90, 2
  %vm561 = vcmp.ge.s32.totalorder %v91, 2
  %v562 = vsel %vm560, %v559, 0.0
  %v563 = vsel %vm561, %v558, 0.0
  %v564 = vld [vmem:[%s7] sm:$0xff]
  %v565 = vld [vmem:[%s7 + $0x8] sm:$0xff]
  %v566 = vld [vmem:[%s7 + $0x10] sm:$0xff]
  %v567 = vld [vmem:[%s7 + $0x18] sm:$0xff]
  %v568 = vld [vmem:[%s7 + $0x20] sm:$0xff]
  %v569 = vld [vmem:[%s7 + $0x28] sm:$0xff]
  %v570 = vld [vmem:[%s7 + $0x30] sm:$0xff]
  %v571 = vld [vmem:[%s7 + $0x38] sm:$0xff]
  %v572 = vld [vmem:[%s7 + $0x40] sm:$0xff]
  %v573 = vld [vmem:[%s7 + $0x48] sm:$0xff]
  %v574 = vld [vmem:[%s7 + $0x50] sm:$0xff]
  %v575 = vld [vmem:[%s7 + $0x58] sm:$0xff]
  %v576 = vld [vmem:[%s7 + $0x60] sm:$0xff]
  %v577 = vld [vmem:[%s7 + $0x68] sm:$0xff]
  %v578 = vld [vmem:[%s7 + $0x70] sm:$0xff]
  %v579 = vld [vmem:[%s7 + $0x78] sm:$0xff]
  %v581 = vsel %vm294, %v553, 0
  %v584 = vsel %vm294, %v554, 0
  %586 = vmatprep.subr.mxu0 0.0
  %587 = vmatpush1.msra.mxu0 %v572
  %588 = vmatprep.subr.mxu0 0.0
  %589 = vmatpush1.msra.mxu0 %v573
  %590 = vmatprep.subr.mxu0 0.0
  %591 = vmatpush1.msra.mxu0 %v574
  %592 = vmatprep.subr.mxu0 0.0
  %593 = vmatpush1.msra.mxu0 %v575
  %594 = vmatprep.subr.mxu0 0.0
  %595 = vmatpush1.msra.mxu0 %v576
  %596 = vmatprep.subr.mxu0 0.0
  %597 = vmatpush1.msra.mxu0 %v577
  %598 = vmatprep.subr.mxu0 0.0
  %599 = vmatpush1.msra.mxu0 %v578
  %600 = vmatprep.subr.mxu0 0.0
  %601 = vmatpush1.msra.mxu0 %v579
  %602 = vmatprep.subr.mxu0 0.0
  %603 = vmatpush1.msra.mxu0 0.0
  %604 = vmatprep.subr.mxu0 0.0
  %605 = vmatpush1.msra.mxu0 0.0
  %606 = vmatprep.subr.mxu0 0.0
  %607 = vmatpush1.msra.mxu0 0.0
  %608 = vmatprep.subr.mxu0 0.0
  %609 = vmatpush1.msra.mxu0 0.0
  %610 = vmatprep.subr.mxu0 0.0
  %611 = vmatpush1.msra.mxu0 0.0
  %612 = vmatprep.subr.mxu0 0.0
  %613 = vmatpush1.msra.mxu0 0.0
  %614 = vmatprep.subr.mxu0 0.0
  %615 = vmatpush1.msra.mxu0 0.0
  %616 = vmatprep.subr.mxu0 0.0
  %617 = vmatpush1.msra.mxu0 0.0
  %618 = vmatprep.subr.mxu0 0.0
  %619 = vmatpush1.msra.mxu0 0.0
  %620 = vmatprep.subr.mxu0 0.0
  %621 = vmatpush1.msra.mxu0 0.0
  %622 = vmatprep.subr.mxu0 0.0
  %623 = vmatpush1.msra.mxu0 0.0
  %624 = vmatprep.subr.mxu0 0.0
  %625 = vmatpush1.msra.mxu0 0.0
  %626 = vmatprep.subr.mxu0 0.0
  %627 = vmatpush1.msra.mxu0 0.0
  %628 = vmatprep.subr.mxu0 0.0
  %629 = vmatpush1.msra.mxu0 0.0
  %630 = vmatprep.subr.mxu0 0.0
  %631 = vmatpush1.msra.mxu0 0.0
  %632 = vmatprep.subr.mxu0 0.0
  %633 = vmatpush1.msra.mxu0 0.0
  %634 = vmatprep.subr.mxu0 0.0
  %635 = vmatpush1.msra.mxu0 0.0
  %636 = vmatprep.subr.mxu0 0.0
  %637 = vmatpush1.msra.mxu0 0.0
  %638 = vmatprep.subr.mxu0 0.0
  %639 = vmatpush1.msra.mxu0 0.0
  %640 = vmatprep.subr.mxu0 0.0
  %641 = vmatpush1.msra.mxu0 0.0
  %642 = vmatprep.subr.mxu0 0.0
  %643 = vmatpush1.msra.mxu0 0.0
  %644 = vmatprep.subr.mxu0 0.0
  %645 = vmatpush1.msra.mxu0 0.0
  %646 = vmatprep.subr.mxu0 0.0
  %647 = vmatpush1.msra.mxu0 0.0
  %648 = vmatprep.subr.mxu0 0.0
  %649 = vmatpush1.msra.mxu0 0.0
  %650 = vmatprep.mubr.f32.mxu0 0.0
  %651 = vmatmul.mubr.f32.gmra.mrb[0].mxu0 %v581
  %v652 = vpop.f32.mrb[0].mxu0
  %v653 = vadd.f32 0.0, %v652
  %v654 = vpop.f32.mrb[0].mxu0
  %655 = vmatprep.mubr.f32.mxu0 0.0
  %656 = vmatmul.mubr.f32.gmra.mrb[0].mxu0 %v584
  %v657 = vpop.f32.mrb[0].mxu0
  %v658 = vadd.f32 0.0, %v657
  %v659 = vpop.f32.mrb[0].mxu0
  %660 = vdwg.mxu0
  %v662 = vsel %vm294, %v562, 0
  %v665 = vsel %vm294, %v563, 0
  %667 = vmatprep.subr.mxu0 0.0
  %668 = vmatpush1.msra.mxu0 %v564
  %669 = vmatprep.subr.mxu0 0.0
  %670 = vmatpush1.msra.mxu0 %v565
  %671 = vmatprep.subr.mxu0 0.0
  %672 = vmatpush1.msra.mxu0 %v566
  %673 = vmatprep.subr.mxu0 0.0
  %674 = vmatpush1.msra.mxu0 %v567
  %675 = vmatprep.subr.mxu0 0.0
  %676 = vmatpush1.msra.mxu0 %v568
  %677 = vmatprep.subr.mxu0 0.0
  %678 = vmatpush1.msra.mxu0 %v569
  %679 = vmatprep.subr.mxu0 0.0
  %680 = vmatpush1.msra.mxu0 %v570
  %681 = vmatprep.subr.mxu0 0.0
  %682 = vmatpush1.msra.mxu0 %v571
  %683 = vmatprep.subr.mxu0 0.0
  %684 = vmatpush1.msra.mxu0 0.0
  %685 = vmatprep.subr.mxu0 0.0
  %686 = vmatpush1.msra.mxu0 0.0
  %687 = vmatprep.subr.mxu0 0.0
  %688 = vmatpush1.msra.mxu0 0.0
  %689 = vmatprep.subr.mxu0 0.0
  %690 = vmatpush1.msra.mxu0 0.0
  %691 = vmatprep.subr.mxu0 0.0
  %692 = vmatpush1.msra.mxu0 0.0
  %693 = vmatprep.subr.mxu0 0.0
  %694 = vmatpush1.msra.mxu0 0.0
  %695 = vmatprep.subr.mxu0 0.0
  %696 = vmatpush1.msra.mxu0 0.0
  %697 = vmatprep.subr.mxu0 0.0
  %698 = vmatpush1.msra.mxu0 0.0
  %699 = vmatprep.subr.mxu0 0.0
  %700 = vmatpush1.msra.mxu0 0.0
  %701 = vmatprep.subr.mxu0 0.0
  %702 = vmatpush1.msra.mxu0 0.0
  %703 = vmatprep.subr.mxu0 0.0
  %704 = vmatpush1.msra.mxu0 0.0
  %705 = vmatprep.subr.mxu0 0.0
  %706 = vmatpush1.msra.mxu0 0.0
  %707 = vmatprep.subr.mxu0 0.0
  %708 = vmatpush1.msra.mxu0 0.0
  %709 = vmatprep.subr.mxu0 0.0
  %710 = vmatpush1.msra.mxu0 0.0
  %711 = vmatprep.subr.mxu0 0.0
  %712 = vmatpush1.msra.mxu0 0.0
  %713 = vmatprep.subr.mxu0 0.0
  %714 = vmatpush1.msra.mxu0 0.0
  %715 = vmatprep.subr.mxu0 0.0
  %716 = vmatpush1.msra.mxu0 0.0
  %717 = vmatprep.subr.mxu0 0.0
  %718 = vmatpush1.msra.mxu0 0.0
  %719 = vmatprep.subr.mxu0 0.0
  %720 = vmatpush1.msra.mxu0 0.0
  %721 = vmatprep.subr.mxu0 0.0
  %722 = vmatpush1.msra.mxu0 0.0
  %723 = vmatprep.subr.mxu0 0.0
  %724 = vmatpush1.msra.mxu0 0.0
  %725 = vmatprep.subr.mxu0 0.0
  %726 = vmatpush1.msra.mxu0 0.0
  %727 = vmatprep.subr.mxu0 0.0
  %728 = vmatpush1.msra.mxu0 0.0
  %729 = vmatprep.subr.mxu0 0.0
  %730 = vmatpush1.msra.mxu0 0.0
  %731 = vmatprep.mubr.f32.mxu0 0.0
  %732 = vmatmul.mubr.f32.gmra.mrb[0].mxu0 %v662
  %v733 = vpop.f32.mrb[0].mxu0
  %v734 = vadd.f32 %v653, %v733
  %v735 = vpop.f32.mrb[0].mxu0
  %736 = vmatprep.mubr.f32.mxu0 0.0
  %737 = vmatmul.mubr.f32.gmra.mrb[0].mxu0 %v665
  %v738 = vpop.f32.mrb[0].mxu0
  %v739 = vadd.f32 %v658, %v738
  %v740 = vpop.f32.mrb[0].mxu0
  %741 = vdwg.mxu0
  %v742 = vld [vmem:[%s8] sm:$0x1]
  %v744 = vlaneseq
  %v745 = vshrl.u32 %v744, 7
  %v746 = vsub.s32 0, %v745
  %v747 = vrot.slane %v742, %v746
  %v749 = vadd.f32 %v734, %v747
  %v750 = vadd.f32 %v739, %v747
  %v751 = vmax.f32 %v749, 0.0
  %v752 = vmax.f32 %v750, 0.0
  %v753 = vrot.slane %v751, 6
  %v754 = vrot.slane %v752, 6
  %v755 = vsel %vm557, %v753, %v754
  %v756 = vsel %vm557, %v754, %v753
  %v757 = vsel %vm560, %v756, 0.0
  %v758 = vsel %vm561, %v755, 0.0
  %v759 = vld [vmem:[%s9] sm:$0xff]
  %v760 = vld [vmem:[%s9 + $0x8] sm:$0xff]
  %v761 = vld [vmem:[%s9 + $0x10] sm:$0xff]
  %v762 = vld [vmem:[%s9 + $0x18] sm:$0xff]
  %v763 = vld [vmem:[%s9 + $0x20] sm:$0xff]
  %v764 = vld [vmem:[%s9 + $0x28] sm:$0xff]
  %v765 = vld [vmem:[%s9 + $0x30] sm:$0xff]
  %v766 = vld [vmem:[%s9 + $0x38] sm:$0xff]
  %v767 = vld [vmem:[%s9 + $0x40] sm:$0xff]
  %v768 = vld [vmem:[%s9 + $0x48] sm:$0xff]
  %v769 = vld [vmem:[%s9 + $0x50] sm:$0xff]
  %v770 = vld [vmem:[%s9 + $0x58] sm:$0xff]
  %v771 = vld [vmem:[%s9 + $0x60] sm:$0xff]
  %v772 = vld [vmem:[%s9 + $0x68] sm:$0xff]
  %v773 = vld [vmem:[%s9 + $0x70] sm:$0xff]
  %v774 = vld [vmem:[%s9 + $0x78] sm:$0xff]
  %v776 = vsel %vm294, %v751, 0
  %v779 = vsel %vm294, %v752, 0
  %781 = vmatprep.subr.mxu0 0.0
  %782 = vmatpush1.msra.mxu0 %v767
  %783 = vmatprep.subr.mxu0 0.0
  %784 = vmatpush1.msra.mxu0 %v768
  %785 = vmatprep.subr.mxu0 0.0
  %786 = vmatpush1.msra.mxu0 %v769
  %787 = vmatprep.subr.mxu0 0.0
  %788 = vmatpush1.msra.mxu0 %v770
  %789 = vmatprep.subr.mxu0 0.0
  %790 = vmatpush1.msra.mxu0 %v771
  %791 = vmatprep.subr.mxu0 0.0
  %792 = vmatpush1.msra.mxu0 %v772
  %793 = vmatprep.subr.mxu0 0.0
  %794 = vmatpush1.msra.mxu0 %v773
  %795 = vmatprep.subr.mxu0 0.0
  %796 = vmatpush1.msra.mxu0 %v774
  %797 = vmatprep.subr.mxu0 0.0
  %798 = vmatpush1.msra.mxu0 0.0
  %799 = vmatprep.subr.mxu0 0.0
  %800 = vmatpush1.msra.mxu0 0.0
  %801 = vmatprep.subr.mxu0 0.0
  %802 = vmatpush1.msra.mxu0 0.0
  %803 = vmatprep.subr.mxu0 0.0
  %804 = vmatpush1.msra.mxu0 0.0
  %805 = vmatprep.subr.mxu0 0.0
  %806 = vmatpush1.msra.mxu0 0.0
  %807 = vmatprep.subr.mxu0 0.0
  %808 = vmatpush1.msra.mxu0 0.0
  %809 = vmatprep.subr.mxu0 0.0
  %810 = vmatpush1.msra.mxu0 0.0
  %811 = vmatprep.subr.mxu0 0.0
  %812 = vmatpush1.msra.mxu0 0.0
  %813 = vmatprep.subr.mxu0 0.0
  %814 = vmatpush1.msra.mxu0 0.0
  %815 = vmatprep.subr.mxu0 0.0
  %816 = vmatpush1.msra.mxu0 0.0
  %817 = vmatprep.subr.mxu0 0.0
  %818 = vmatpush1.msra.mxu0 0.0
  %819 = vmatprep.subr.mxu0 0.0
  %820 = vmatpush1.msra.mxu0 0.0
  %821 = vmatprep.subr.mxu0 0.0
  %822 = vmatpush1.msra.mxu0 0.0
  %823 = vmatprep.subr.mxu0 0.0
  %824 = vmatpush1.msra.mxu0 0.0
  %825 = vmatprep.subr.mxu0 0.0
  %826 = vmatpush1.msra.mxu0 0.0
  %827 = vmatprep.subr.mxu0 0.0
  %828 = vmatpush1.msra.mxu0 0.0
  %829 = vmatprep.subr.mxu0 0.0
  %830 = vmatpush1.msra.mxu0 0.0
  %831 = vmatprep.subr.mxu0 0.0
  %832 = vmatpush1.msra.mxu0 0.0
  %833 = vmatprep.subr.mxu0 0.0
  %834 = vmatpush1.msra.mxu0 0.0
  %835 = vmatprep.subr.mxu0 0.0
  %836 = vmatpush1.msra.mxu0 0.0
  %837 = vmatprep.subr.mxu0 0.0
  %838 = vmatpush1.msra.mxu0 0.0
  %839 = vmatprep.subr.mxu0 0.0
  %840 = vmatpush1.msra.mxu0 0.0
  %841 = vmatprep.subr.mxu0 0.0
  %842 = vmatpush1.msra.mxu0 0.0
  %843 = vmatprep.subr.mxu0 0.0
  %844 = vmatpush1.msra.mxu0 0.0
  %845 = vmatprep.mubr.f32.mxu0 0.0
  %846 = vmatmul.mubr.f32.gmra.mrb[0].mxu0 %v776
  %v847 = vpop.f32.mrb[0].mxu0
  %v848 = vadd.f32 0.0, %v847
  %v849 = vpop.f32.mrb[0].mxu0
  %850 = vmatprep.mubr.f32.mxu0 0.0
  %851 = vmatmul.mubr.f32.gmra.mrb[0].mxu0 %v779
  %v852 = vpop.f32.mrb[0].mxu0
  %v853 = vadd.f32 0.0, %v852
  %v854 = vpop.f32.mrb[0].mxu0
  %855 = vdwg.mxu0
  %v857 = vsel %vm294, %v757, 0
  %v860 = vsel %vm294, %v758, 0
  %862 = vmatprep.subr.mxu0 0.0
  %863 = vmatpush1.msra.mxu0 %v759
  %864 = vmatprep.subr.mxu0 0.0
  %865 = vmatpush1.msra.mxu0 %v760
  %866 = vmatprep.subr.mxu0 0.0
  %867 = vmatpush1.msra.mxu0 %v761
  %868 = vmatprep.subr.mxu0 0.0
  %869 = vmatpush1.msra.mxu0 %v762
  %870 = vmatprep.subr.mxu0 0.0
  %871 = vmatpush1.msra.mxu0 %v763
  %872 = vmatprep.subr.mxu0 0.0
  %873 = vmatpush1.msra.mxu0 %v764
  %874 = vmatprep.subr.mxu0 0.0
  %875 = vmatpush1.msra.mxu0 %v765
  %876 = vmatprep.subr.mxu0 0.0
  %877 = vmatpush1.msra.mxu0 %v766
  %878 = vmatprep.subr.mxu0 0.0
  %879 = vmatpush1.msra.mxu0 0.0
  %880 = vmatprep.subr.mxu0 0.0
  %881 = vmatpush1.msra.mxu0 0.0
  %882 = vmatprep.subr.mxu0 0.0
  %883 = vmatpush1.msra.mxu0 0.0
  %884 = vmatprep.subr.mxu0 0.0
  %885 = vmatpush1.msra.mxu0 0.0
  %886 = vmatprep.subr.mxu0 0.0
  %887 = vmatpush1.msra.mxu0 0.0
  %888 = vmatprep.subr.mxu0 0.0
  %889 = vmatpush1.msra.mxu0 0.0
  %890 = vmatprep.subr.mxu0 0.0
  %891 = vmatpush1.msra.mxu0 0.0
  %892 = vmatprep.subr.mxu0 0.0
  %893 = vmatpush1.msra.mxu0 0.0
  %894 = vmatprep.subr.mxu0 0.0
  %895 = vmatpush1.msra.mxu0 0.0
  %896 = vmatprep.subr.mxu0 0.0
  %897 = vmatpush1.msra.mxu0 0.0
  %898 = vmatprep.subr.mxu0 0.0
  %899 = vmatpush1.msra.mxu0 0.0
  %900 = vmatprep.subr.mxu0 0.0
  %901 = vmatpush1.msra.mxu0 0.0
  %902 = vmatprep.subr.mxu0 0.0
  %903 = vmatpush1.msra.mxu0 0.0
  %904 = vmatprep.subr.mxu0 0.0
  %905 = vmatpush1.msra.mxu0 0.0
  %906 = vmatprep.subr.mxu0 0.0
  %907 = vmatpush1.msra.mxu0 0.0
  %908 = vmatprep.subr.mxu0 0.0
  %909 = vmatpush1.msra.mxu0 0.0
  %910 = vmatprep.subr.mxu0 0.0
  %911 = vmatpush1.msra.mxu0 0.0
  %912 = vmatprep.subr.mxu0 0.0
  %913 = vmatpush1.msra.mxu0 0.0
  %914 = vmatprep.subr.mxu0 0.0
  %915 = vmatpush1.msra.mxu0 0.0
  %916 = vmatprep.subr.mxu0 0.0
  %917 = vmatpush1.msra.mxu0 0.0
  %918 = vmatprep.subr.mxu0 0.0
  %919 = vmatpush1.msra.mxu0 0.0
  %920 = vmatprep.subr.mxu0 0.0
  %921 = vmatpush1.msra.mxu0 0.0
  %922 = vmatprep.subr.mxu0 0.0
  %923 = vmatpush1.msra.mxu0 0.0
  %924 = vmatprep.subr.mxu0 0.0
  %925 = vmatpush1.msra.mxu0 0.0
  %926 = vmatprep.mubr.f32.mxu0 0.0
  %927 = vmatmul.mubr.f32.gmra.mrb[0].mxu0 %v857
  %v928 = vpop.f32.mrb[0].mxu0
  %v929 = vadd.f32 %v848, %v928
  %v930 = vpop.f32.mrb[0].mxu0
  %931 = vmatprep.mubr.f32.mxu0 0.0
  %932 = vmatmul.mubr.f32.gmra.mrb[0].mxu0 %v860
  %v933 = vpop.f32.mrb[0].mxu0
  %v934 = vadd.f32 %v853, %v933
  %v935 = vpop.f32.mrb[0].mxu0
  %936 = vdwg.mxu0
  %v937 = vld [vmem:[%s10] sm:$0x1]
  %v939 = vlaneseq
  %v940 = vshrl.u32 %v939, 7
  %v941 = vsub.s32 0, %v940
  %v942 = vrot.slane %v937, %v941
  %v944 = vadd.f32 %v929, %v942
  %v945 = vadd.f32 %v934, %v942
  %v946 = vmax.f32 %v944, 0.0
  %v947 = vmax.f32 %v945, 0.0
  %v948 = vadd.f32 %v946, %v553
  %v949 = vadd.f32 %v947, %v554
  %v950 = vmax.f32 %v948, 0.0
  %v951 = vmax.f32 %v949, 0.0
  %v952 = vrot.slane %v950, 4
  %v953 = vrot.slane %v951, 4
  %vm954 = vcmp.lt.s32.totalorder %v63, 4
  %v955 = vsel %vm954, %v952, %v953
  %v956 = vsel %vm954, %v953, %v952
  %vm957 = vcmp.ge.s32.totalorder %v90, 4
  %vm958 = vcmp.ge.s32.totalorder %v91, 4
  %v959 = vsel %vm957, %v956, 0.0
  %v960 = vsel %vm958, %v955, 0.0
  %v961 = vld [vmem:[%s11] sm:$0xff]
  %v962 = vld [vmem:[%s11 + $0x8] sm:$0xff]
  %v963 = vld [vmem:[%s11 + $0x10] sm:$0xff]
  %v964 = vld [vmem:[%s11 + $0x18] sm:$0xff]
  %v965 = vld [vmem:[%s11 + $0x20] sm:$0xff]
  %v966 = vld [vmem:[%s11 + $0x28] sm:$0xff]
  %v967 = vld [vmem:[%s11 + $0x30] sm:$0xff]
  %v968 = vld [vmem:[%s11 + $0x38] sm:$0xff]
  %v969 = vld [vmem:[%s11 + $0x40] sm:$0xff]
  %v970 = vld [vmem:[%s11 + $0x48] sm:$0xff]
  %v971 = vld [vmem:[%s11 + $0x50] sm:$0xff]
  %v972 = vld [vmem:[%s11 + $0x58] sm:$0xff]
  %v973 = vld [vmem:[%s11 + $0x60] sm:$0xff]
  %v974 = vld [vmem:[%s11 + $0x68] sm:$0xff]
  %v975 = vld [vmem:[%s11 + $0x70] sm:$0xff]
  %v976 = vld [vmem:[%s11 + $0x78] sm:$0xff]
  %v978 = vsel %vm294, %v950, 0
  %v981 = vsel %vm294, %v951, 0
  %983 = vmatprep.subr.mxu0 0.0
  %984 = vmatpush1.msra.mxu0 %v969
  %985 = vmatprep.subr.mxu0 0.0
  %986 = vmatpush1.msra.mxu0 %v970
  %987 = vmatprep.subr.mxu0 0.0
  %988 = vmatpush1.msra.mxu0 %v971
  %989 = vmatprep.subr.mxu0 0.0
  %990 = vmatpush1.msra.mxu0 %v972
  %991 = vmatprep.subr.mxu0 0.0
  %992 = vmatpush1.msra.mxu0 %v973
  %993 = vmatprep.subr.mxu0 0.0
  %994 = vmatpush1.msra.mxu0 %v974
  %995 = vmatprep.subr.mxu0 0.0
  %996 = vmatpush1.msra.mxu0 %v975
  %997 = vmatprep.subr.mxu0 0.0
  %998 = vmatpush1.msra.mxu0 %v976
  %999 = vmatprep.subr.mxu0 0.0
  %1000 = vmatpush1.msra.mxu0 0.0
  %1001 = vmatprep.subr.mxu0 0.0
  %1002 = vmatpush1.msra.mxu0 0.0
  %1003 = vmatprep.subr.mxu0 0.0
  %1004 = vmatpush1.msra.mxu0 0.0
  %1005 = vmatprep.subr.mxu0 0.0
  %1006 = vmatpush1.msra.mxu0 0.0
  %1007 = vmatprep.subr.mxu0 0.0
  %1008 = vmatpush1.msra.mxu0 0.0
  %1009 = vmatprep.subr.mxu0 0.0
  %1010 = vmatpush1.msra.mxu0 0.0
  %1011 = vmatprep.subr.mxu0 0.0
  %1012 = vmatpush1.msra.mxu0 0.0
  %1013 = vmatprep.subr.mxu0 0.0
  %1014 = vmatpush1.msra.mxu0 0.0
  %1015 = vmatprep.subr.mxu0 0.0
  %1016 = vmatpush1.msra.mxu0 0.0
  %1017 = vmatprep.subr.mxu0 0.0
  %1018 = vmatpush1.msra.mxu0 0.0
  %1019 = vmatprep.subr.mxu0 0.0
  %1020 = vmatpush1.msra.mxu0 0.0
  %1021 = vmatprep.subr.mxu0 0.0
  %1022 = vmatpush1.msra.mxu0 0.0
  %1023 = vmatprep.subr.mxu0 0.0
  %1024 = vmatpush1.msra.mxu0 0.0
  %1025 = vmatprep.subr.mxu0 0.0
  %1026 = vmatpush1.msra.mxu0 0.0
  %1027 = vmatprep.subr.mxu0 0.0
  %1028 = vmatpush1.msra.mxu0 0.0
  %1029 = vmatprep.subr.mxu0 0.0
  %1030 = vmatpush1.msra.mxu0 0.0
  %1031 = vmatprep.subr.mxu0 0.0
  %1032 = vmatpush1.msra.mxu0 0.0
  %1033 = vmatprep.subr.mxu0 0.0
  %1034 = vmatpush1.msra.mxu0 0.0
  %1035 = vmatprep.subr.mxu0 0.0
  %1036 = vmatpush1.msra.mxu0 0.0
  %1037 = vmatprep.subr.mxu0 0.0
  %1038 = vmatpush1.msra.mxu0 0.0
  %1039 = vmatprep.subr.mxu0 0.0
  %1040 = vmatpush1.msra.mxu0 0.0
  %1041 = vmatprep.subr.mxu0 0.0
  %1042 = vmatpush1.msra.mxu0 0.0
  %1043 = vmatprep.subr.mxu0 0.0
  %1044 = vmatpush1.msra.mxu0 0.0
  %1045 = vmatprep.subr.mxu0 0.0
  %1046 = vmatpush1.msra.mxu0 0.0
  %1047 = vmatprep.mubr.f32.mxu0 0.0
  %1048 = vmatmul.mubr.f32.gmra.mrb[0].mxu0 %v978
  %v1049 = vpop.f32.mrb[0].mxu0
  %v1050 = vadd.f32 0.0, %v1049
  %v1051 = vpop.f32.mrb[0].mxu0
  %1052 = vmatprep.mubr.f32.mxu0 0.0
  %1053 = vmatmul.mubr.f32.gmra.mrb[0].mxu0 %v981
  %v1054 = vpop.f32.mrb[0].mxu0
  %v1055 = vadd.f32 0.0, %v1054
  %v1056 = vpop.f32.mrb[0].mxu0
  %1057 = vdwg.mxu0
  %v1059 = vsel %vm294, %v959, 0
  %v1062 = vsel %vm294, %v960, 0
  %1064 = vmatprep.subr.mxu0 0.0
  %1065 = vmatpush1.msra.mxu0 %v961
  %1066 = vmatprep.subr.mxu0 0.0
  %1067 = vmatpush1.msra.mxu0 %v962
  %1068 = vmatprep.subr.mxu0 0.0
  %1069 = vmatpush1.msra.mxu0 %v963
  %1070 = vmatprep.subr.mxu0 0.0
  %1071 = vmatpush1.msra.mxu0 %v964
  %1072 = vmatprep.subr.mxu0 0.0
  %1073 = vmatpush1.msra.mxu0 %v965
  %1074 = vmatprep.subr.mxu0 0.0
  %1075 = vmatpush1.msra.mxu0 %v966
  %1076 = vmatprep.subr.mxu0 0.0
  %1077 = vmatpush1.msra.mxu0 %v967
  %1078 = vmatprep.subr.mxu0 0.0
  %1079 = vmatpush1.msra.mxu0 %v968
  %1080 = vmatprep.subr.mxu0 0.0
  %1081 = vmatpush1.msra.mxu0 0.0
  %1082 = vmatprep.subr.mxu0 0.0
  %1083 = vmatpush1.msra.mxu0 0.0
  %1084 = vmatprep.subr.mxu0 0.0
  %1085 = vmatpush1.msra.mxu0 0.0
  %1086 = vmatprep.subr.mxu0 0.0
  %1087 = vmatpush1.msra.mxu0 0.0
  %1088 = vmatprep.subr.mxu0 0.0
  %1089 = vmatpush1.msra.mxu0 0.0
  %1090 = vmatprep.subr.mxu0 0.0
  %1091 = vmatpush1.msra.mxu0 0.0
  %1092 = vmatprep.subr.mxu0 0.0
  %1093 = vmatpush1.msra.mxu0 0.0
  %1094 = vmatprep.subr.mxu0 0.0
  %1095 = vmatpush1.msra.mxu0 0.0
  %1096 = vmatprep.subr.mxu0 0.0
  %1097 = vmatpush1.msra.mxu0 0.0
  %1098 = vmatprep.subr.mxu0 0.0
  %1099 = vmatpush1.msra.mxu0 0.0
  %1100 = vmatprep.subr.mxu0 0.0
  %1101 = vmatpush1.msra.mxu0 0.0
  %1102 = vmatprep.subr.mxu0 0.0
  %1103 = vmatpush1.msra.mxu0 0.0
  %1104 = vmatprep.subr.mxu0 0.0
  %1105 = vmatpush1.msra.mxu0 0.0
  %1106 = vmatprep.subr.mxu0 0.0
  %1107 = vmatpush1.msra.mxu0 0.0
  %1108 = vmatprep.subr.mxu0 0.0
  %1109 = vmatpush1.msra.mxu0 0.0
  %1110 = vmatprep.subr.mxu0 0.0
  %1111 = vmatpush1.msra.mxu0 0.0
  %1112 = vmatprep.subr.mxu0 0.0
  %1113 = vmatpush1.msra.mxu0 0.0
  %1114 = vmatprep.subr.mxu0 0.0
  %1115 = vmatpush1.msra.mxu0 0.0
  %1116 = vmatprep.subr.mxu0 0.0
  %1117 = vmatpush1.msra.mxu0 0.0
  %1118 = vmatprep.subr.mxu0 0.0
  %1119 = vmatpush1.msra.mxu0 0.0
  %1120 = vmatprep.subr.mxu0 0.0
  %1121 = vmatpush1.msra.mxu0 0.0
  %1122 = vmatprep.subr.mxu0 0.0
  %1123 = vmatpush1.msra.mxu0 0.0
  %1124 = vmatprep.subr.mxu0 0.0
  %1125 = vmatpush1.msra.mxu0 0.0
  %1126 = vmatprep.subr.mxu0 0.0
  %1127 = vmatpush1.msra.mxu0 0.0
  %1128 = vmatprep.mubr.f32.mxu0 0.0
  %1129 = vmatmul.mubr.f32.gmra.mrb[0].mxu0 %v1059
  %v1130 = vpop.f32.mrb[0].mxu0
  %v1131 = vadd.f32 %v1050, %v1130
  %v1132 = vpop.f32.mrb[0].mxu0
  %1133 = vmatprep.mubr.f32.mxu0 0.0
  %1134 = vmatmul.mubr.f32.gmra.mrb[0].mxu0 %v1062
  %v1135 = vpop.f32.mrb[0].mxu0
  %v1136 = vadd.f32 %v1055, %v1135
  %v1137 = vpop.f32.mrb[0].mxu0
  %1138 = vdwg.mxu0
  %v1139 = vld [vmem:[%s12] sm:$0x1]
  %v1141 = vlaneseq
  %v1142 = vshrl.u32 %v1141, 7
  %v1143 = vsub.s32 0, %v1142
  %v1144 = vrot.slane %v1139, %v1143
  %v1146 = vadd.f32 %v1131, %v1144
  %v1147 = vadd.f32 %v1136, %v1144
  %v1148 = vmax.f32 %v1146, 0.0
  %v1149 = vmax.f32 %v1147, 0.0
  %v1150 = vrot.slane %v1148, 4
  %v1151 = vrot.slane %v1149, 4
  %v1152 = vsel %vm954, %v1150, %v1151
  %v1153 = vsel %vm954, %v1151, %v1150
  %v1154 = vsel %vm957, %v1153, 0.0
  %v1155 = vsel %vm958, %v1152, 0.0
  %v1156 = vld [vmem:[%s13] sm:$0xff]
  %v1157 = vld [vmem:[%s13 + $0x8] sm:$0xff]
  %v1158 = vld [vmem:[%s13 + $0x10] sm:$0xff]
  %v1159 = vld [vmem:[%s13 + $0x18] sm:$0xff]
  %v1160 = vld [vmem:[%s13 + $0x20] sm:$0xff]
  %v1161 = vld [vmem:[%s13 + $0x28] sm:$0xff]
  %v1162 = vld [vmem:[%s13 + $0x30] sm:$0xff]
  %v1163 = vld [vmem:[%s13 + $0x38] sm:$0xff]
  %v1164 = vld [vmem:[%s13 + $0x40] sm:$0xff]
  %v1165 = vld [vmem:[%s13 + $0x48] sm:$0xff]
  %v1166 = vld [vmem:[%s13 + $0x50] sm:$0xff]
  %v1167 = vld [vmem:[%s13 + $0x58] sm:$0xff]
  %v1168 = vld [vmem:[%s13 + $0x60] sm:$0xff]
  %v1169 = vld [vmem:[%s13 + $0x68] sm:$0xff]
  %v1170 = vld [vmem:[%s13 + $0x70] sm:$0xff]
  %v1171 = vld [vmem:[%s13 + $0x78] sm:$0xff]
  %v1173 = vsel %vm294, %v1148, 0
  %v1176 = vsel %vm294, %v1149, 0
  %1178 = vmatprep.subr.mxu0 0.0
  %1179 = vmatpush1.msra.mxu0 %v1164
  %1180 = vmatprep.subr.mxu0 0.0
  %1181 = vmatpush1.msra.mxu0 %v1165
  %1182 = vmatprep.subr.mxu0 0.0
  %1183 = vmatpush1.msra.mxu0 %v1166
  %1184 = vmatprep.subr.mxu0 0.0
  %1185 = vmatpush1.msra.mxu0 %v1167
  %1186 = vmatprep.subr.mxu0 0.0
  %1187 = vmatpush1.msra.mxu0 %v1168
  %1188 = vmatprep.subr.mxu0 0.0
  %1189 = vmatpush1.msra.mxu0 %v1169
  %1190 = vmatprep.subr.mxu0 0.0
  %1191 = vmatpush1.msra.mxu0 %v1170
  %1192 = vmatprep.subr.mxu0 0.0
  %1193 = vmatpush1.msra.mxu0 %v1171
  %1194 = vmatprep.subr.mxu0 0.0
  %1195 = vmatpush1.msra.mxu0 0.0
  %1196 = vmatprep.subr.mxu0 0.0
  %1197 = vmatpush1.msra.mxu0 0.0
  %1198 = vmatprep.subr.mxu0 0.0
  %1199 = vmatpush1.msra.mxu0 0.0
  %1200 = vmatprep.subr.mxu0 0.0
  %1201 = vmatpush1.msra.mxu0 0.0
  %1202 = vmatprep.subr.mxu0 0.0
  %1203 = vmatpush1.msra.mxu0 0.0
  %1204 = vmatprep.subr.mxu0 0.0
  %1205 = vmatpush1.msra.mxu0 0.0
  %1206 = vmatprep.subr.mxu0 0.0
  %1207 = vmatpush1.msra.mxu0 0.0
  %1208 = vmatprep.subr.mxu0 0.0
  %1209 = vmatpush1.msra.mxu0 0.0
  %1210 = vmatprep.subr.mxu0 0.0
  %1211 = vmatpush1.msra.mxu0 0.0
  %1212 = vmatprep.subr.mxu0 0.0
  %1213 = vmatpush1.msra.mxu0 0.0
  %1214 = vmatprep.subr.mxu0 0.0
  %1215 = vmatpush1.msra.mxu0 0.0
  %1216 = vmatprep.subr.mxu0 0.0
  %1217 = vmatpush1.msra.mxu0 0.0
  %1218 = vmatprep.subr.mxu0 0.0
  %1219 = vmatpush1.msra.mxu0 0.0
  %1220 = vmatprep.subr.mxu0 0.0
  %1221 = vmatpush1.msra.mxu0 0.0
  %1222 = vmatprep.subr.mxu0 0.0
  %1223 = vmatpush1.msra.mxu0 0.0
  %1224 = vmatprep.subr.mxu0 0.0
  %1225 = vmatpush1.msra.mxu0 0.0
  %1226 = vmatprep.subr.mxu0 0.0
  %1227 = vmatpush1.msra.mxu0 0.0
  %1228 = vmatprep.subr.mxu0 0.0
  %1229 = vmatpush1.msra.mxu0 0.0
  %1230 = vmatprep.subr.mxu0 0.0
  %1231 = vmatpush1.msra.mxu0 0.0
  %1232 = vmatprep.subr.mxu0 0.0
  %1233 = vmatpush1.msra.mxu0 0.0
  %1234 = vmatprep.subr.mxu0 0.0
  %1235 = vmatpush1.msra.mxu0 0.0
  %1236 = vmatprep.subr.mxu0 0.0
  %1237 = vmatpush1.msra.mxu0 0.0
  %1238 = vmatprep.subr.mxu0 0.0
  %1239 = vmatpush1.msra.mxu0 0.0
  %1240 = vmatprep.subr.mxu0 0.0
  %1241 = vmatpush1.msra.mxu0 0.0
  %1242 = vmatprep.mubr.f32.mxu0 0.0
  %1243 = vmatmul.mubr.f32.gmra.mrb[0].mxu0 %v1173
  %v1244 = vpop.f32.mrb[0].mxu0
  %v1245 = vadd.f32 0.0, %v1244
  %v1246 = vpop.f32.mrb[0].mxu0
  %1247 = vmatprep.mubr.f32.mxu0 0.0
  %1248 = vmatmul.mubr.f32.gmra.mrb[0].mxu0 %v1176
  %v1249 = vpop.f32.mrb[0].mxu0
  %v1250 = vadd.f32 0.0, %v1249
  %v1251 = vpop.f32.mrb[0].mxu0
  %1252 = vdwg.mxu0
  %v1254 = vsel %vm294, %v1154, 0
  %v1257 = vsel %vm294, %v1155, 0
  %1259 = vmatprep.subr.mxu0 0.0
  %1260 = vmatpush1.msra.mxu0 %v1156
  %1261 = vmatprep.subr.mxu0 0.0
  %1262 = vmatpush1.msra.mxu0 %v1157
  %1263 = vmatprep.subr.mxu0 0.0
  %1264 = vmatpush1.msra.mxu0 %v1158
  %1265 = vmatprep.subr.mxu0 0.0
  %1266 = vmatpush1.msra.mxu0 %v1159
  %1267 = vmatprep.subr.mxu0 0.0
  %1268 = vmatpush1.msra.mxu0 %v1160
  %1269 = vmatprep.subr.mxu0 0.0
  %1270 = vmatpush1.msra.mxu0 %v1161
  %1271 = vmatprep.subr.mxu0 0.0
  %1272 = vmatpush1.msra.mxu0 %v1162
  %1273 = vmatprep.subr.mxu0 0.0
  %1274 = vmatpush1.msra.mxu0 %v1163
  %1275 = vmatprep.subr.mxu0 0.0
  %1276 = vmatpush1.msra.mxu0 0.0
  %1277 = vmatprep.subr.mxu0 0.0
  %1278 = vmatpush1.msra.mxu0 0.0
  %1279 = vmatprep.subr.mxu0 0.0
  %1280 = vmatpush1.msra.mxu0 0.0
  %1281 = vmatprep.subr.mxu0 0.0
  %1282 = vmatpush1.msra.mxu0 0.0
  %1283 = vmatprep.subr.mxu0 0.0
  %1284 = vmatpush1.msra.mxu0 0.0
  %1285 = vmatprep.subr.mxu0 0.0
  %1286 = vmatpush1.msra.mxu0 0.0
  %1287 = vmatprep.subr.mxu0 0.0
  %1288 = vmatpush1.msra.mxu0 0.0
  %1289 = vmatprep.subr.mxu0 0.0
  %1290 = vmatpush1.msra.mxu0 0.0
  %1291 = vmatprep.subr.mxu0 0.0
  %1292 = vmatpush1.msra.mxu0 0.0
  %1293 = vmatprep.subr.mxu0 0.0
  %1294 = vmatpush1.msra.mxu0 0.0
  %1295 = vmatprep.subr.mxu0 0.0
  %1296 = vmatpush1.msra.mxu0 0.0
  %1297 = vmatprep.subr.mxu0 0.0
  %1298 = vmatpush1.msra.mxu0 0.0
  %1299 = vmatprep.subr.mxu0 0.0
  %1300 = vmatpush1.msra.mxu0 0.0
  %1301 = vmatprep.subr.mxu0 0.0
  %1302 = vmatpush1.msra.mxu0 0.0
  %1303 = vmatprep.subr.mxu0 0.0
  %1304 = vmatpush1.msra.mxu0 0.0
  %1305 = vmatprep.subr.mxu0 0.0
  %1306 = vmatpush1.msra.mxu0 0.0
  %1307 = vmatprep.subr.mxu0 0.0
  %1308 = vmatpush1.msra.mxu0 0.0
  %1309 = vmatprep.subr.mxu0 0.0
  %1310 = vmatpush1.msra.mxu0 0.0
  %1311 = vmatprep.subr.mxu0 0.0
  %1312 = vmatpush1.msra.mxu0 0.0
  %1313 = vmatprep.subr.mxu0 0.0
  %1314 = vmatpush1.msra.mxu0 0.0
  %1315 = vmatprep.subr.mxu0 0.0
  %1316 = vmatpush1.msra.mxu0 0.0
  %1317 = vmatprep.subr.mxu0 0.0
  %1318 = vmatpush1.msra.mxu0 0.0
  %1319 = vmatprep.subr.mxu0 0.0
  %1320 = vmatpush1.msra.mxu0 0.0
  %1321 = vmatprep.subr.mxu0 0.0
  %1322 = vmatpush1.msra.mxu0 0.0
  %1323 = vmatprep.mubr.f32.mxu0 0.0
  %1324 = vmatmul.mubr.f32.gmra.mrb[0].mxu0 %v1254
  %v1325 = vpop.f32.mrb[0].mxu0
  %v1326 = vadd.f32 %v1245, %v1325
  %v1327 = vpop.f32.mrb[0].mxu0
  %1328 = vmatprep.mubr.f32.mxu0 0.0
  %1329 = vmatmul.mubr.f32.gmra.mrb[0].mxu0 %v1257
  %v1330 = vpop.f32.mrb[0].mxu0
  %v1331 = vadd.f32 %v1250, %v1330
  %v1332 = vpop.f32.mrb[0].mxu0
  %1333 = vdwg.mxu0
  %v1334 = vld [vmem:[%s14] sm:$0x1]
  %v1336 = vlaneseq
  %v1337 = vshrl.u32 %v1336, 7
  %v1338 = vsub.s32 0, %v1337
  %v1339 = vrot.slane %v1334, %v1338
  %v1341 = vadd.f32 %v1326, %v1339
  %v1342 = vadd.f32 %v1331, %v1339
  %v1343 = vmax.f32 %v1341, 0.0
  %v1344 = vmax.f32 %v1342, 0.0
  %v1345 = vadd.f32 %v1343, %v950
  %v1346 = vadd.f32 %v1344, %v951
  %v1347 = vmax.f32 %v1345, 0.0
  %v1348 = vmax.f32 %v1346, 0.0
  %v1349 = vld [vmem:[%s15] sm:$0xff]
  %v1350 = vld [vmem:[%s15 + $0x8] sm:$0xff]
  %v1351 = vld [vmem:[%s15 + $0x10] sm:$0xff]
  %v1352 = vld [vmem:[%s15 + $0x18] sm:$0xff]
  %v1353 = vld [vmem:[%s15 + $0x20] sm:$0xff]
  %v1354 = vld [vmem:[%s15 + $0x28] sm:$0xff]
  %v1355 = vld [vmem:[%s15 + $0x30] sm:$0xff]
  %v1356 = vld [vmem:[%s15 + $0x38] sm:$0xff]
  %v1357 = vld [vmem:[#allocation2] sm:$0x1]
  %v1359 = vlaneseq
  %v1360 = vshrl.u32 %v1359, 7
  %v1361 = vsub.s32 0, %v1360
  %v1362 = vrot.slane %v1357, %v1361
  %1363 = vset.pattern.permute.xlu0 0
  %1364 = vperm.xlu0 %1363, %v1362
  %v1365 = vpop.permute.xlu0 %1364
  %v1368 = vsel %vm294, %v1347, 0
  %v1371 = vsel %vm294, %v1348, 0
  %1373 = vmatprep.subr.mxu0 0.0
  %1374 = vmatpush1.msra.mxu0 %v1349
  %1375 = vmatprep.subr.mxu0 0.0
  %1376 = vmatpush1.msra.mxu0 %v1350
  %1377 = vmatprep.subr.mxu0 0.0
  %1378 = vmatpush1.msra.mxu0 %v1351
  %1379 = vmatprep.subr.mxu0 0.0
  %1380 = vmatpush1.msra.mxu0 %v1352
  %1381 = vmatprep.subr.mxu0 0.0
  %1382 = vmatpush1.msra.mxu0 %v1353
  %1383 = vmatprep.subr.mxu0 0.0
  %1384 = vmatpush1.msra.mxu0 %v1354
  %1385 = vmatprep.subr.mxu0 0.0
  %1386 = vmatpush1.msra.mxu0 %v1355
  %1387 = vmatprep.subr.mxu0 0.0
  %1388 = vmatpush1.msra.mxu0 %v1356
  %1389 = vmatprep.subr.mxu0 0.0
  %1390 = vmatpush1.msra.mxu0 0.0
  %1391 = vmatprep.subr.mxu0 0.0
  %1392 = vmatpush1.msra.mxu0 0.0
  %1393 = vmatprep.subr.mxu0 0.0
  %1394 = vmatpush1.msra.mxu0 0.0
  %1395 = vmatprep.subr.mxu0 0.0
  %1396 = vmatpush1.msra.mxu0 0.0
  %1397 = vmatprep.subr.mxu0 0.0
  %1398 = vmatpush1.msra.mxu0 0.0
  %1399 = vmatprep.subr.mxu0 0.0
  %1400 = vmatpush1.msra.mxu0 0.0
  %1401 = vmatprep.subr.mxu0 0.0
  %1402 = vmatpush1.msra.mxu0 0.0
  %1403 = vmatprep.subr.mxu0 0.0
  %1404 = vmatpush1.msra.mxu0 0.0
  %1405 = vmatprep.subr.mxu0 0.0
  %1406 = vmatpush1.msra.mxu0 0.0
  %1407 = vmatprep.subr.mxu0 0.0
  %1408 = vmatpush1.msra.mxu0 0.0
  %1409 = vmatprep.subr.mxu0 0.0
  %1410 = vmatpush1.msra.mxu0 0.0
  %1411 = vmatprep.subr.mxu0 0.0
  %1412 = vmatpush1.msra.mxu0 0.0
  %1413 = vmatprep.subr.mxu0 0.0
  %1414 = vmatpush1.msra.mxu0 0.0
  %1415 = vmatprep.subr.mxu0 0.0
  %1416 = vmatpush1.msra.mxu0 0.0
  %1417 = vmatprep.subr.mxu0 0.0
  %1418 = vmatpush1.msra.mxu0 0.0
  %1419 = vmatprep.subr.mxu0 0.0
  %1420 = vmatpush1.msra.mxu0 0.0
  %1421 = vmatprep.subr.mxu0 0.0
  %1422 = vmatpush1.msra.mxu0 0.0
  %1423 = vmatprep.subr.mxu0 0.0
  %1424 = vmatpush1.msra.mxu0 0.0
  %1425 = vmatprep.subr.mxu0 0.0
  %1426 = vmatpush1.msra.mxu0 0.0
  %1427 = vmatprep.subr.mxu0 0.0
  %1428 = vmatpush1.msra.mxu0 0.0
  %1429 = vmatprep.subr.mxu0 0.0
  %1430 = vmatpush1.msra.mxu0 0.0
  %1431 = vmatprep.subr.mxu0 0.0
  %1432 = vmatpush1.msra.mxu0 0.0
  %1433 = vmatprep.subr.mxu0 0.0
  %1434 = vmatpush1.msra.mxu0 0.0
  %1435 = vmatprep.subr.mxu0 0.0
  %1436 = vmatpush1.msra.mxu0 0.0
  %1437 = vmatprep.mubr.f32.mxu0 0.0
  %1438 = vmatmul.mubr.f32.gmra.mrb[0].mxu0 %v1368
  %v1439 = vpop.f32.mrb[0].mxu0
  %v1440 = vadd.f32 %v1365, %v1439
  %v1441 = vpop.f32.mrb[0].mxu0
  %1442 = vmatprep.mubr.f32.mxu0 0.0
  %1443 = vmatmul.mubr.f32.gmra.mrb[0].mxu0 %v1371
  %v1444 = vpop.f32.mrb[0].mxu0
  %v1445 = vadd.f32 %v1365, %v1444
  %v1446 = vpop.f32.mrb[0].mxu0
  %1447 = vdwg.mxu0
  %v1448 = vxor.u32 %v1440, 2147483648
  %v1449 = vxor.u32 %v1445, 2147483648
  %v1450 = vmul.f32 %v1448, 1.442695
  %v1451 = vpow.pop %v1450
  %v1452 = vmul.f32 %v1449, 1.442695
  %v1453 = vpow.pop %v1452
  %v1454 = vadd.f32 %v1451, 1.0
  %v1455 = vadd.f32 %v1453, 1.0
  %v1456 = vrcp.pop %v1454
  %v1457 = vmul.f32 1.0, %v1456
  %v1458 = vrcp.pop %v1455
  %v1459 = vmul.f32 1.0, %v1458
  %vm1460 = vcmask 15360
  %1461 = vst.msk [vmem:[%s17] sm:$0xff] %vm1460, %v1457
  %1462 = vst.msk [vmem:[%s17 + $0x8] sm:$0xff] %vm1460, %v1459
  // Predicated region
  $region70: #{tpu_custom_call.1} parent=0 // pred_check
    _
  $region71: #{tpu_custom_call.1} parent=0 // pred_check_branch
    %1464 = sbr.rel (0) target = $region73
  $region72: #{tpu_custom_call.1} parent=0 // pred_region
    _
  $region73: #{tpu_custom_call.1} parent=0 // pred_fallthru
    _
  // Predicated region
  $region74: #{tpu_custom_call.1} parent=0 // pred_check
    _
  $region75: #{tpu_custom_call.1} parent=0 // pred_check_branch
    %1466 = sbr.rel (0) target = $region77
  $region76: #{tpu_custom_call.1} parent=0 // pred_region
    _
  $region77: #{tpu_custom_call.1} parent=0 // pred_fallthru
    _

</llo_original>
